<compile_context>
chip_gen: v5e
topology: v5e:2x2
jax: 0.10.0
libtpu: 0.0.40
codegen_flags: <defaults>
</compile_context>

<pallas_src>
import numpy as np
import jax
import jax.numpy as jnp
from jax import lax
from jax.experimental import pallas as pl
from jax.experimental.pallas import tpu as pltpu

N_BINS = 15
C_PAD = 128      # classes padded to one full lane width
HIST_PAD = 128   # histogram padded to one full lane width


def _nr_reciprocal(x):
    """EUP approximate reciprocal + one Newton-Raphson step (~f32 accurate)."""
    r = pl.reciprocal(x, approx=True)
    return r * (2.0 - x * r)


# ----------------------------------------------------------------------------- kernel

def _calib_kernel(x_ref, w_ref, b_ref, hist_ref, out_ref, acc_ref):
    k = pl.program_id(1)
    nk = pl.num_programs(1)

    @pl.when(k == 0)
    def _():
        acc_ref[...] = jnp.zeros_like(acc_ref)

    # ---- base model: linear head. bf16 cast happens in-register (no HBM round trip). ----
    x = x_ref[...].astype(jnp.bfloat16)                       # (TB, TK)
    acc_ref[...] += jnp.dot(x, w_ref[...],                    # (TK, C_PAD) bf16, MXU-native
                            preferred_element_type=jnp.float32)

    @pl.when(k == nk - 1)
    def _():
        logits = acc_ref[...] + b_ref[...]                    # padded classes have bias -1e30

        # ---- softmax over classes (dim=1); padded classes -> exactly 0 ----
        m = jnp.max(logits, axis=1, keepdims=True)
        e = jnp.exp(logits - m)
        sm = e * _nr_reciprocal(jnp.sum(e, axis=1, keepdims=True))          # (TB, C_PAD)

        TB, CP = sm.shape
        cls_iota = lax.broadcasted_iota(jnp.int32, (TB, CP), 1)

        # torch.max(sm, dim=1): value + first argmax index; equality mask reused below
        conf = jnp.max(sm, axis=1, keepdims=True)                           # (TB, 1)
        pred = jnp.min(jnp.where(sm == conf, cls_iota, CP), axis=1, keepdims=True)
        is_pred = cls_iota == pred                                          # (TB, C_PAD)

        # ---- get_posterior: torch.histc(conf, bins=N_BINS, min=0, max=1) lookup ----
        bin_idx = jnp.clip(jnp.floor(conf * N_BINS).astype(jnp.int32), 0, N_BINS - 1)
        bins_iota = lax.broadcasted_iota(jnp.int32, (TB, HIST_PAD), 1)
        est = jnp.sum(jnp.where(bins_iota == bin_idx, hist_ref[...], 0.0),
                      axis=1, keepdims=True)
        valid = est != -1.0
        posterior = jnp.where(valid, est, conf)                             # (TB, 1)

        # ---- rescale non-argmax entries to (1 - posterior), set argmax entry, renormalize ----
        rescaled = jnp.where(is_pred, 0.0, sm)
        denom = jnp.maximum(jnp.sum(rescaled, axis=1, keepdims=True), 1e-30)
        rescaled = (1.0 - posterior) * rescaled * _nr_reciprocal(denom)
        full = jnp.where(is_pred, posterior, rescaled)
        full = full * _nr_reciprocal(jnp.sum(full, axis=1, keepdims=True))

        # ---- single lane-dense output slab: [sm (0..127) | flag (128) | pred (129)] ----
        out_ref[:, :CP] = full
        meta = jnp.where(cls_iota == 0, valid.astype(jnp.float32),
                         jnp.where(cls_iota == 1, pred.astype(jnp.float32), 0.0))
        out_ref[:, CP:] = meta


# ----------------------------------------------------------------------------- wrapper helpers

def _hw_budget():
    """(vmem working-set budget, scoped vmem limit, #TensorCores) per generation."""
    kind = ""
    try:
        kind = jax.devices()[0].device_kind.lower()
    except Exception:
        pass
    big_vmem = any(t in kind for t in ("v4", "v5", "v6"))     # 128 MiB physical parts
    if big_vmem:
        budget, limit = 64 << 20, 80 << 20                    # raise v5e's 16 MiB scoped default
    else:
        budget, limit = 20 << 20, 28 << 20                    # v7x-safe (64 MiB physical / 32 scoped)
    n_tc = 2 if any(t in kind for t in ("v4", "v5p", "v7")) else 1
    return budget, limit, n_tc


def _choose_k_tile(D, budget):
    """Feature-dim tile. Single shot unless the (TK,128) bf16 weight tile would hog VMEM."""
    if D * C_PAD * 2 <= budget // 3:
        return D
    max_tk = max(128, ((budget // 3) // (2 * C_PAD * 2)) // 128 * 128)
    start = min(max_tk, (D // 128) * 128)
    for cand in range(start, 127, -128):                       # TK must divide D -> no OOB garbage
        if D % cand == 0:
            return cand
    return D                                                   # no clean divisor: single shot


def _choose_batch_tile(B, tk, budget, nk, n_tc):
    if B <= 8:
        return B
    w_bufs = 1 if nk == 1 else 2
    resident = w_bufs * tk * C_PAD * 2 + 2 * (2 * C_PAD) * 4 + HIST_PAD * 4
    # per row: x (f32, double-buffered) + out slab (f32, double-buffered) + f32 acc + epilogue temps
    per_row = 2 * tk * 4 + 2 * (2 * C_PAD) * 4 + C_PAD * 4 + 8 * C_PAD * 4
    tb = (budget - resident) // per_row
    tb = min(tb, 1024)                                         # >=512-row tiles already ~85% of roofline
    if n_tc >= 2:
        tb = min(tb, -(-B // 2))                               # keep >=2 parallel steps for megacore
    tb = min(tb, B)
    if tb >= B:
        return B
    return int(max(8, (tb // 8) * 8))


def _build_call(B, D, TB, TK, vmem_limit, single_buffer_resident):
    nb = pl.cdiv(B, TB)
    nk = D // TK

    def const_spec(shape, index_map):
        # Grid-invariant operand: one VMEM buffer is enough (default is double-buffered).
        if single_buffer_resident:
            return pl.BlockSpec(shape, index_map, pipeline_mode=pl.Buffered(1))
        return pl.BlockSpec(shape, index_map)

    if nk == 1:
        w_spec = const_spec((TK, C_PAD), lambda i, k: (k, 0))
    else:
        w_spec = pl.BlockSpec((TK, C_PAD), lambda i, k: (k, 0))

    in_specs = [
        pl.BlockSpec((TB, TK), lambda i, k: (i, k)),           # x     f32, streamed
        w_spec,                                                # w     bf16 (D, 128), MXU-native
        const_spec((1, C_PAD), lambda i, k: (0, 0)),           # bias  f32, resident
        const_spec((1, HIST_PAD), lambda i, k: (0, 0)),        # hist  f32, resident
    ]

    cost = pl.CostEstimate(
        flops=2 * B * D * C_PAD,
        transcendentals=B * C_PAD + 3 * B,
        bytes_accessed=(B * D * 4 + D * C_PAD * 2 * (1 if nk == 1 else nb)
                        + C_PAD * 4 + HIST_PAD * 4 + B * 2 * C_PAD * 4),
    )

    return pl.pallas_call(
        _calib_kernel,
        out_shape=jax.ShapeDtypeStruct((B, 2 * C_PAD), jnp.float32),
        grid=(nb, nk),
        in_specs=in_specs,
        out_specs=pl.BlockSpec((TB, 2 * C_PAD), lambda i, k: (i, 0)),
        scratch_shapes=[pltpu.VMEM((TB, C_PAD), jnp.float32)],
        compiler_params=pltpu.CompilerParams(
            dimension_semantics=("parallel", "arbitrary"),
            vmem_limit_bytes=vmem_limit),
        cost_estimate=cost,
    )


# ----------------------------------------------------------------------------- public API

def prepare_histogram_binning_params(w, b, hist):
    """One-time prep (cache the result across calls).

    w: (D, n_classes) f32; b: (n_classes,); hist: (N_BINS,) from histogram_binning().
      w_pad    (D, C_PAD) bf16   — lane-dense, zero-padded classes, consumed by the MXU directly
      b_pad    (1, C_PAD) f32    — -1e30 on padded classes => their softmax is exactly 0
      hist_pad (1, HIST_PAD) f32 — -1 sentinel preserved; zero-padded lanes are never selected
    """
    D, C = w.shape
    assert C <= C_PAD and N_BINS <= HIST_PAD
    w_pad = jnp.zeros((D, C_PAD), jnp.bfloat16).at[:, :C].set(w.astype(jnp.bfloat16))
    b_pad = jnp.full((1, C_PAD), -1e30, jnp.float32).at[0, :C].set(b.astype(jnp.float32))
    hist_pad = jnp.zeros((1, HIST_PAD), jnp.float32).at[0, :N_BINS].set(
        hist.astype(jnp.float32))
    return (w_pad, b_pad, hist_pad, C)


def histogram_binning_calibration_fwd(x_nchw, params):
    """x_nchw: (B, C, H, W) f32; params: output of prepare_histogram_binning_params."""
    w_pad, b_pad, hist_pad, n_classes = params
    B = x_nchw.shape[0]
    D = w_pad.shape[0]
    # f32 activations go straight into the kernel; the bf16 cast happens in-register there.
    x2d = x_nchw.reshape(B, D).astype(jnp.float32)

    budget, vmem_limit, n_tc = _hw_budget()
    TK = _choose_k_tile(D, budget)
    nk = D // TK
    TB = _choose_batch_tile(B, TK, budget, nk, n_tc)

    try:
        out = _build_call(B, D, TB, TK, vmem_limit, single_buffer_resident=True)(
            x2d, w_pad, b_pad, hist_pad)
    except Exception:
        # Fallback for jax versions without BlockSpec(pipeline_mode=pl.Buffered(1)).
        out = _build_call(B, D, TB, TK, vmem_limit, single_buffer_resident=False)(
            x2d, w_pad, b_pad, hist_pad)

    sm_calib = out[:, :n_classes]
    valid_flag = out[:, C_PAD]
    predictions = out[:, C_PAD + 1].astype(jnp.int32)
    return sm_calib, valid_flag, predictions


# ----------------------------------------------------------------------------- reference + test

def _reference(x_nchw, w, b, hist):
    x = np.asarray(x_nchw, np.float32).reshape(x_nchw.shape[0], -1)
    logits = x @ np.asarray(w, np.float32) + np.asarray(b, np.float32)
    z = logits - logits.max(axis=1, keepdims=True)
    sm = np.exp(z) / np.exp(z).sum(axis=1, keepdims=True)
    conf = sm.max(axis=1)
    pred = sm.argmax(axis=1)
    bin_idx = np.clip(np.floor(conf * N_BINS).astype(np.int64), 0, N_BINS - 1)
    est = np.asarray(hist, np.float32)[bin_idx]
    valid = (est != -1.0).astype(np.float32)
    posterior = np.where(valid > 0, est, conf)
    out = np.empty_like(sm)
    for i in range(sm.shape[0]):
        mask = np.ones(sm.shape[1], np.float32)
        mask[pred[i]] = 0.0
        r = sm[i] * mask
        r = (1.0 - posterior[i]) * (r / r.sum())
        r[pred[i]] = posterior[i]
        out[i] = r / r.sum()
    return out, valid, pred


if __name__ == "__main__":
    key = jax.random.PRNGKey(0)
    kx, kw, kb = jax.random.split(key, 3)

    B, C_in, H, W_sp = 2, 4, 16, 16        # input images (B, C, H, W)
    n_classes = 16
    D = C_in * H * W_sp

    x = jax.random.normal(kx, (B, C_in, H, W_sp), dtype=jnp.float32)
    # deterministic "base model" parameters (synthetic linear classifier head)
    # TODO(synk): an arbitrary base_model backbone is not fused here; only a linear head is.
    w = jax.random.normal(kw, (D, n_classes), dtype=jnp.float32) * 0.05
    b = jax.random.normal(kb, (n_classes,), dtype=jnp.float32) * 0.1
    # deterministic histogram (as if histogram_binning() had been run);
    # a couple of -1 entries exercise the "invalid bin" path.
    hist = (jnp.arange(N_BINS, dtype=jnp.float32) + 0.5) / N_BINS
    hist = hist.at[0].set(-1.0).at[N_BINS - 1].set(-1.0)

    # one-time padded/cast parameter prep (cache and reuse across forward calls)
    params = prepare_histogram_binning_params(w, b, hist)
    jax.block_until_ready(params[:3])

    sm_calib, valid_flag, predictions = histogram_binning_calibration_fwd(x, params)
    jax.block_until_ready((sm_calib, valid_flag, predictions))

    # reference uses the same bf16-quantized activations/weights the kernel sees
    x_q = np.asarray(x.astype(jnp.bfloat16).astype(jnp.float32))
    w_q = np.asarray(w.astype(jnp.bfloat16).astype(jnp.float32))
    ref_sm, ref_valid, ref_pred = _reference(x_q, w_q, np.asarray(b), np.asarray(hist))

    assert np.allclose(np.asarray(sm_calib), ref_sm, atol=5e-5, rtol=5e-5)
    assert np.array_equal(np.asarray(valid_flag), ref_valid)
    assert np.array_equal(np.asarray(predictions), ref_pred)
    print("KERNEL_OK")
</pallas_src>

<mosaic_0001>
module attributes {stable_mosaic.version = 11 : i64} {
  func.func @_calib_kernel(%arg0: i32, %arg1: i32, %arg2: memref<2x1024xf32, #tpu.memory_space<vmem>>, %arg3: memref<1024x128xbf16, #tpu.memory_space<vmem>>, %arg4: memref<1x128xf32, #tpu.memory_space<vmem>>, %arg5: memref<1x128xf32, #tpu.memory_space<vmem>>, %arg6: memref<2x256xf32, #tpu.memory_space<vmem>>, %arg7: memref<2x128xf32, #tpu.memory_space<vmem>>) attributes {dimension_semantics = [#tpu.dimension_semantics<parallel>, #tpu.dimension_semantics<arbitrary>], iteration_bounds = array<i64: 1, 1>, scalar_prefetch = 0 : i64, scratch_operands = 1 : i64, tpu.core_type = #tpu.core_type<tc>, window_params = [{transform_indices = @transform_0, window_bounds = array<i64: 2, 1024>}, {pipeline_mode = #tpu.pipeline_mode<synchronous>, transform_indices = @transform_1, window_bounds = array<i64: 1024, 128>}, {pipeline_mode = #tpu.pipeline_mode<synchronous>, transform_indices = @transform_2, window_bounds = array<i64: 1, 128>}, {pipeline_mode = #tpu.pipeline_mode<synchronous>, transform_indices = @transform_3, window_bounds = array<i64: 1, 128>}, {transform_indices = @transform_4, window_bounds = array<i64: 2, 256>}]} {
    %c0_i32 = arith.constant 0 : i32
    %0 = arith.cmpi eq, %arg1, %c0_i32 : i32
    %1 = arith.extui %0 : i1 to i32
    %c0_i32_0 = arith.constant 0 : i32
    %2 = arith.cmpi ne, %1, %c0_i32_0 : i32
    scf.if %2 {
      %cst_10 = arith.constant 0.000000e+00 : f32
      %13 = vector.broadcast %cst_10 : f32 to vector<2x128xf32>
      %c0_11 = arith.constant 0 : index
      %c0_12 = arith.constant 0 : index
      %14 = vector.load %arg7[%c0_11, %c0_12] : memref<2x128xf32, #tpu.memory_space<vmem>>, vector<2x128xf32>
      tpu.vector_store %arg7[%c0_11, %c0_12], %13 {strides = array<i32>} : memref<2x128xf32, #tpu.memory_space<vmem>>, vector<2x128xf32>,
    } else {
    }
    %c0 = arith.constant 0 : index
    %c0_1 = arith.constant 0 : index
    %3 = vector.load %arg2[%c0, %c0_1] : memref<2x1024xf32, #tpu.memory_space<vmem>>, vector<2x1024xf32>
    %4 = arith.truncf %3 : vector<2x1024xf32> to vector<2x1024xbf16>
    %c0_2 = arith.constant 0 : index
    %c0_3 = arith.constant 0 : index
    %5 = vector.load %arg7[%c0_2, %c0_3] : memref<2x128xf32, #tpu.memory_space<vmem>>, vector<2x128xf32>
    %c0_4 = arith.constant 0 : index
    %c0_5 = arith.constant 0 : index
    %6 = vector.load %arg3[%c0_4, %c0_5] : memref<1024x128xbf16, #tpu.memory_space<vmem>>, vector<1024x128xbf16>
    %cst = arith.constant dense<0.000000e+00> : vector<2x128xf32>
    %7 = tpu.matmul %4, %6, %cst {dimension_numbers = #tpu.dot_dimension_numbers<[1], [0], [0], [1], [0, 0, 1, 1], [], []>} : vector<2x1024xbf16>, vector<1024x128xbf16>, vector<2x128xf32> -> vector<2x128xf32>
    %8 = arith.addf %5, %7 : vector<2x128xf32>
    %c0_6 = arith.constant 0 : index
    %c0_7 = arith.constant 0 : index
    %9 = vector.load %arg7[%c0_6, %c0_7] : memref<2x128xf32, #tpu.memory_space<vmem>>, vector<2x128xf32>
    tpu.vector_store %arg7[%c0_6, %c0_7], %8 {strides = array<i32>} : memref<2x128xf32, #tpu.memory_space<vmem>>, vector<2x128xf32>,
    %c0_i32_8 = arith.constant 0 : i32
    %10 = arith.cmpi eq, %arg1, %c0_i32_8 : i32
    %11 = arith.extui %10 : i1 to i32
    %c0_i32_9 = arith.constant 0 : i32
    %12 = arith.cmpi ne, %11, %c0_i32_9 : i32
    scf.if %12 {
      %c0_10 = arith.constant 0 : index
      %c0_11 = arith.constant 0 : index
      %13 = vector.load %arg7[%c0_10, %c0_11] : memref<2x128xf32, #tpu.memory_space<vmem>>, vector<2x128xf32>
      %c0_12 = arith.constant 0 : index
      %c0_13 = arith.constant 0 : index
      %14 = vector.load %arg4[%c0_12, %c0_13] : memref<1x128xf32, #tpu.memory_space<vmem>>, vector<1x128xf32>
      %15 = vector.broadcast %14 : vector<1x128xf32> to vector<2x128xf32>
      %16 = arith.addf %13, %15 : vector<2x128xf32>
      %cst_14 = arith.constant dense<0xFF800000> : vector<2xf32>
      %17 = vector.multi_reduction <maximumf>, %16, %cst_14 [1] : vector<2x128xf32> to vector<2xf32>
      %18 = vector.shape_cast %17 : vector<2xf32> to vector<2x1xf32>
      %19 = vector.broadcast %18 : vector<2x1xf32> to vector<2x128xf32>
      %20 = arith.subf %16, %19 : vector<2x128xf32>
      %21 = math.exp %20 : vector<2x128xf32>
      %cst_15 = arith.constant dense<0.000000e+00> : vector<2xf32>
      %22 = vector.multi_reduction <add>, %21, %cst_15 [1] : vector<2x128xf32> to vector<2xf32>
      %23 = vector.shape_cast %22 : vector<2xf32> to vector<2x1xf32>
      %24 = tpu.reciprocal %23 {approx = true} : vector<2x1xf32> -> vector<2x1xf32>
      %25 = arith.mulf %23, %24 : vector<2x1xf32>
      %cst_16 = arith.constant 2.000000e+00 : f32
      %26 = vector.broadcast %cst_16 : f32 to vector<2x1xf32>
      %27 = arith.subf %26, %25 : vector<2x1xf32>
      %28 = arith.mulf %24, %27 : vector<2x1xf32>
      %29 = vector.broadcast %28 : vector<2x1xf32> to vector<2x128xf32>
      %30 = arith.mulf %21, %29 : vector<2x128xf32>
      %31 = tpu.iota {dimensions = array<i32: 1>} : vector<2x128xi32>
      %cst_17 = arith.constant dense<0xFF800000> : vector<2xf32>
      %32 = vector.multi_reduction <maximumf>, %30, %cst_17 [1] : vector<2x128xf32> to vector<2xf32>
      %33 = vector.shape_cast %32 : vector<2xf32> to vector<2x1xf32>
      %34 = vector.broadcast %33 : vector<2x1xf32> to vector<2x128xf32>
      %35 = arith.cmpf oeq, %30, %34 : vector<2x128xf32>
      %c128_i32 = arith.constant 128 : i32
      %36 = vector.broadcast %c128_i32 : i32 to vector<2x128xi32>
      %37 = arith.select %35, %31, %36 : vector<2x128xi1>, vector<2x128xi32>
      %cst_18 = arith.constant dense<2147483647> : vector<2xi32>
      %38 = vector.multi_reduction <minsi>, %37, %cst_18 [1] : vector<2x128xi32> to vector<2xi32>
      %39 = vector.shape_cast %38 : vector<2xi32> to vector<2x1xi32>
      %40 = vector.broadcast %39 : vector<2x1xi32> to vector<2x128xi32>
      %41 = arith.cmpi eq, %31, %40 : vector<2x128xi32>
      %cst_19 = arith.constant 1.500000e+01 : f32
      %42 = vector.broadcast %cst_19 : f32 to vector<2x1xf32>
      %43 = arith.mulf %33, %42 : vector<2x1xf32>
      %44 = math.floor %43 : vector<2x1xf32>
      %45 = arith.fptosi %44 : vector<2x1xf32> to vector<2x1xi32>
      %c0_i32_20 = arith.constant 0 : i32
      %c14_i32 = arith.constant 14 : i32
      %46 = vector.broadcast %c0_i32_20 : i32 to vector<2x1xi32>
      %47 = arith.maxsi %46, %45 : vector<2x1xi32>
      %48 = vector.broadcast %c14_i32 : i32 to vector<2x1xi32>
      %49 = arith.minsi %48, %47 : vector<2x1xi32>
      %50 = tpu.iota {dimensions = array<i32: 1>} : vector<2x128xi32>
      %51 = vector.broadcast %49 : vector<2x1xi32> to vector<2x128xi32>
      %52 = arith.cmpi eq, %50, %51 : vector<2x128xi32>
      %c0_21 = arith.constant 0 : index
      %c0_22 = arith.constant 0 : index
      %53 = vector.load %arg5[%c0_21, %c0_22] : memref<1x128xf32, #tpu.memory_space<vmem>>, vector<1x128xf32>
      %cst_23 = arith.constant 0.000000e+00 : f32
      %54 = vector.shape_cast %53 : vector<1x128xf32> to vector<1x128xf32>
      %55 = vector.broadcast %54 : vector<1x128xf32> to vector<2x128xf32>
      %56 = vector.broadcast %cst_23 : f32 to vector<2x128xf32>
      %57 = arith.select %52, %55, %56 : vector<2x128xi1>, vector<2x128xf32>
      %cst_24 = arith.constant dense<0.000000e+00> : vector<2xf32>
      %58 = vector.multi_reduction <add>, %57, %cst_24 [1] : vector<2x128xf32> to vector<2xf32>
      %59 = vector.shape_cast %58 : vector<2xf32> to vector<2x1xf32>
      %cst_25 = arith.constant -1.000000e+00 : f32
      %60 = vector.broadcast %cst_25 : f32 to vector<2x1xf32>
      %61 = arith.cmpf one, %59, %60 : vector<2x1xf32>
      %62 = arith.select %61, %59, %33 : vector<2x1xi1>, vector<2x1xf32>
      %cst_26 = arith.constant 0.000000e+00 : f32
      %63 = vector.broadcast %cst_26 : f32 to vector<2x128xf32>
      %64 = arith.select %41, %63, %30 : vector<2x128xi1>, vector<2x128xf32>
      %cst_27 = arith.constant dense<0.000000e+00> : vector<2xf32>
      %65 = vector.multi_reduction <add>, %64, %cst_27 [1] : vector<2x128xf32> to vector<2xf32>
      %66 = vector.shape_cast %65 : vector<2xf32> to vector<2x1xf32>
      %cst_28 = arith.constant 1.000000e-30 : f32
      %67 = vector.broadcast %cst_28 : f32 to vector<2x1xf32>
      %68 = arith.maximumf %66, %67 : vector<2x1xf32>
      %cst_29 = arith.constant 1.000000e+00 : f32
      %69 = vector.broadcast %cst_29 : f32 to vector<2x1xf32>
      %70 = arith.subf %69, %62 : vector<2x1xf32>
      %71 = vector.broadcast %70 : vector<2x1xf32> to vector<2x128xf32>
      %72 = arith.mulf %71, %64 : vector<2x128xf32>
      %73 = tpu.reciprocal %68 {approx = true} : vector<2x1xf32> -> vector<2x1xf32>
      %74 = arith.mulf %68, %73 : vector<2x1xf32>
      %cst_30 = arith.constant 2.000000e+00 : f32
      %75 = vector.broadcast %cst_30 : f32 to vector<2x1xf32>
      %76 = arith.subf %75, %74 : vector<2x1xf32>
      %77 = arith.mulf %73, %76 : vector<2x1xf32>
      %78 = vector.broadcast %77 : vector<2x1xf32> to vector<2x128xf32>
      %79 = arith.mulf %72, %78 : vector<2x128xf32>
      %80 = vector.shape_cast %62 : vector<2x1xf32> to vector<2x1xf32>
      %81 = vector.broadcast %80 : vector<2x1xf32> to vector<2x128xf32>
      %82 = arith.select %41, %81, %79 : vector<2x128xi1>, vector<2x128xf32>
      %cst_31 = arith.constant dense<0.000000e+00> : vector<2xf32>
      %83 = vector.multi_reduction <add>, %82, %cst_31 [1] : vector<2x128xf32> to vector<2xf32>
      %84 = vector.shape_cast %83 : vector<2xf32> to vector<2x1xf32>
      %85 = tpu.reciprocal %84 {approx = true} : vector<2x1xf32> -> vector<2x1xf32>
      %86 = arith.mulf %84, %85 : vector<2x1xf32>
      %cst_32 = arith.constant 2.000000e+00 : f32
      %87 = vector.broadcast %cst_32 : f32 to vector<2x1xf32>
      %88 = arith.subf %87, %86 : vector<2x1xf32>
      %89 = arith.mulf %85, %88 : vector<2x1xf32>
      %90 = vector.broadcast %89 : vector<2x1xf32> to vector<2x128xf32>
      %91 = arith.mulf %82, %90 : vector<2x128xf32>
      %c0_33 = arith.constant 0 : index
      %c0_34 = arith.constant 0 : index
      %92 = vector.load %arg6[%c0_33, %c0_34] : memref<2x256xf32, #tpu.memory_space<vmem>>, vector<2x128xf32>
      tpu.vector_store %arg6[%c0_33, %c0_34], %91 {strides = array<i32>} : memref<2x256xf32, #tpu.memory_space<vmem>>, vector<2x128xf32>,
      %c0_i32_35 = arith.constant 0 : i32
      %93 = vector.broadcast %c0_i32_35 : i32 to vector<2x128xi32>
      %94 = arith.cmpi eq, %31, %93 : vector<2x128xi32>
      %95 = arith.extui %61 : vector<2x1xi1> to vector<2x1xi32>
      %96 = arith.sitofp %95 : vector<2x1xi32> to vector<2x1xf32>
      %c1_i32 = arith.constant 1 : i32
      %97 = vector.broadcast %c1_i32 : i32 to vector<2x128xi32>
      %98 = arith.cmpi eq, %31, %97 : vector<2x128xi32>
      %99 = arith.sitofp %39 : vector<2x1xi32> to vector<2x1xf32>
      %cst_36 = arith.constant 0.000000e+00 : f32
      %100 = vector.shape_cast %99 : vector<2x1xf32> to vector<2x1xf32>
      %101 = vector.broadcast %100 : vector<2x1xf32> to vector<2x128xf32>
      %102 = vector.broadcast %cst_36 : f32 to vector<2x128xf32>
      %103 = arith.select %98, %101, %102 : vector<2x128xi1>, vector<2x128xf32>
      %104 = vector.shape_cast %96 : vector<2x1xf32> to vector<2x1xf32>
      %105 = vector.broadcast %104 : vector<2x1xf32> to vector<2x128xf32>
      %106 = arith.select %94, %105, %103 : vector<2x128xi1>, vector<2x128xf32>
      %c0_37 = arith.constant 0 : index
      %c128 = arith.constant 128 : index
      %107 = vector.load %arg6[%c0_37, %c128] : memref<2x256xf32, #tpu.memory_space<vmem>>, vector<2x128xf32>
      tpu.vector_store %arg6[%c0_37, %c128], %106 {strides = array<i32>} : memref<2x256xf32, #tpu.memory_space<vmem>>, vector<2x128xf32>,
    } else {
    }
    return
  }
  func.func @transform_0(%arg0: i32, %arg1: i32) -> (i32, i32) {
    %c0_i32 = arith.constant 0 : i32
    return %arg0, %arg1 : i32, i32
  }
  func.func @transform_1(%arg0: i32, %arg1: i32) -> (i32, i32) {
    %c0_i32 = arith.constant 0 : i32
    %c0_i32_0 = arith.constant 0 : i32
    return %arg1, %c0_i32 : i32, i32
  }
  func.func @transform_2(%arg0: i32, %arg1: i32) -> (i32, i32) {
    %c0_i32 = arith.constant 0 : i32
    %c0_i32_0 = arith.constant 0 : i32
    %c0_i32_1 = arith.constant 0 : i32
    return %c0_i32, %c0_i32_0 : i32, i32
  }
  func.func @transform_3(%arg0: i32, %arg1: i32) -> (i32, i32) {
    %c0_i32 = arith.constant 0 : i32
    %c0_i32_0 = arith.constant 0 : i32
    %c0_i32_1 = arith.constant 0 : i32
    return %c0_i32, %c0_i32_0 : i32, i32
  }
  func.func @transform_4(%arg0: i32, %arg1: i32) -> (i32, i32) {
    %c0_i32 = arith.constant 0 : i32
    %c0_i32_0 = arith.constant 0 : i32
    return %arg0, %c0_i32 : i32, i32
  }
}

module attributes {stable_mosaic.version = 11 : i64} {
  func.func @_calib_kernel(%arg0: i32, %arg1: i32, %arg2: memref<2x1024xf32, #tpu.memory_space<vmem>>, %arg3: memref<1024x128xbf16, #tpu.memory_space<vmem>>, %arg4: memref<1x128xf32, #tpu.memory_space<vmem>>, %arg5: memref<1x128xf32, #tpu.memory_space<vmem>>, %arg6: memref<2x256xf32, #tpu.memory_space<vmem>>, %arg7: memref<2x128xf32, #tpu.memory_space<vmem>>) attributes {dimension_semantics = [#tpu.dimension_semantics<parallel>, #tpu.dimension_semantics<arbitrary>], iteration_bounds = array<i64: 1, 1>, scalar_prefetch = 0 : i64, scratch_operands = 1 : i64, tpu.core_type = #tpu.core_type<tc>, window_params = [{transform_indices = @transform_0, window_bounds = array<i64: 2, 1024>}, {transform_indices = @transform_1, window_bounds = array<i64: 1024, 128>}, {pipeline_mode = #tpu.pipeline_mode<synchronous>, transform_indices = @transform_2, window_bounds = array<i64: 1, 128>}, {pipeline_mode = #tpu.pipeline_mode<synchronous>, transform_indices = @transform_3, window_bounds = array<i64: 1, 128>}, {transform_indices = @transform_4, window_bounds = array<i64: 2, 256>}]} {
    %c0_i32 = arith.constant 0 : i32
    %0 = arith.cmpi eq, %arg1, %c0_i32 : i32
    %1 = arith.extui %0 : i1 to i32
    %c0_i32_0 = arith.constant 0 : i32
    %2 = arith.cmpi ne, %1, %c0_i32_0 : i32
    scf.if %2 {
      %cst_10 = arith.constant 0.000000e+00 : f32
      %13 = vector.broadcast %cst_10 : f32 to vector<2x128xf32>
      %c0_11 = arith.constant 0 : index
      %c0_12 = arith.constant 0 : index
      %14 = vector.load %arg7[%c0_11, %c0_12] : memref<2x128xf32, #tpu.memory_space<vmem>>, vector<2x128xf32>
      tpu.vector_store %arg7[%c0_11, %c0_12], %13 {strides = array<i32>} : memref<2x128xf32, #tpu.memory_space<vmem>>, vector<2x128xf32>,
    } else {
    }
    %c0 = arith.constant 0 : index
    %c0_1 = arith.constant 0 : index
    %3 = vector.load %arg2[%c0, %c0_1] : memref<2x1024xf32, #tpu.memory_space<vmem>>, vector<2x1024xf32>
    %4 = arith.truncf %3 : vector<2x1024xf32> to vector<2x1024xbf16>
    %c0_2 = arith.constant 0 : index
    %c0_3 = arith.constant 0 : index
    %5 = vector.load %arg7[%c0_2, %c0_3] : memref<2x128xf32, #tpu.memory_space<vmem>>, vector<2x128xf32>
    %c0_4 = arith.constant 0 : index
    %c0_5 = arith.constant 0 : index
    %6 = vector.load %arg3[%c0_4, %c0_5] : memref<1024x128xbf16, #tpu.memory_space<vmem>>, vector<1024x128xbf16>
    %cst = arith.constant dense<0.000000e+00> : vector<2x128xf32>
    %7 = tpu.matmul %4, %6, %cst {dimension_numbers = #tpu.dot_dimension_numbers<[1], [0], [0], [1], [0, 0, 1, 1], [], []>} : vector<2x1024xbf16>, vector<1024x128xbf16>, vector<2x128xf32> -> vector<2x128xf32>
    %8 = arith.addf %5, %7 : vector<2x128xf32>
    %c0_6 = arith.constant 0 : index
    %c0_7 = arith.constant 0 : index
    %9 = vector.load %arg7[%c0_6, %c0_7] : memref<2x128xf32, #tpu.memory_space<vmem>>, vector<2x128xf32>
    tpu.vector_store %arg7[%c0_6, %c0_7], %8 {strides = array<i32>} : memref<2x128xf32, #tpu.memory_space<vmem>>, vector<2x128xf32>,
    %c0_i32_8 = arith.constant 0 : i32
    %10 = arith.cmpi eq, %arg1, %c0_i32_8 : i32
    %11 = arith.extui %10 : i1 to i32
    %c0_i32_9 = arith.constant 0 : i32
    %12 = arith.cmpi ne, %11, %c0_i32_9 : i32
    scf.if %12 {
      %c0_10 = arith.constant 0 : index
      %c0_11 = arith.constant 0 : index
      %13 = vector.load %arg7[%c0_10, %c0_11] : memref<2x128xf32, #tpu.memory_space<vmem>>, vector<2x128xf32>
      %c0_12 = arith.constant 0 : index
      %c0_13 = arith.constant 0 : index
      %14 = vector.load %arg4[%c0_12, %c0_13] : memref<1x128xf32, #tpu.memory_space<vmem>>, vector<1x128xf32>
      %15 = vector.broadcast %14 : vector<1x128xf32> to vector<2x128xf32>
      %16 = arith.addf %13, %15 : vector<2x128xf32>
      %cst_14 = arith.constant dense<0xFF800000> : vector<2xf32>
      %17 = vector.multi_reduction <maximumf>, %16, %cst_14 [1] : vector<2x128xf32> to vector<2xf32>
      %18 = vector.shape_cast %17 : vector<2xf32> to vector<2x1xf32>
      %19 = vector.broadcast %18 : vector<2x1xf32> to vector<2x128xf32>
      %20 = arith.subf %16, %19 : vector<2x128xf32>
      %21 = math.exp %20 : vector<2x128xf32>
      %cst_15 = arith.constant dense<0.000000e+00> : vector<2xf32>
      %22 = vector.multi_reduction <add>, %21, %cst_15 [1] : vector<2x128xf32> to vector<2xf32>
      %23 = vector.shape_cast %22 : vector<2xf32> to vector<2x1xf32>
      %24 = tpu.reciprocal %23 {approx = true} : vector<2x1xf32> -> vector<2x1xf32>
      %25 = arith.mulf %23, %24 : vector<2x1xf32>
      %cst_16 = arith.constant 2.000000e+00 : f32
      %26 = vector.broadcast %cst_16 : f32 to vector<2x1xf32>
      %27 = arith.subf %26, %25 : vector<2x1xf32>
      %28 = arith.mulf %24, %27 : vector<2x1xf32>
      %29 = vector.broadcast %28 : vector<2x1xf32> to vector<2x128xf32>
      %30 = arith.mulf %21, %29 : vector<2x128xf32>
      %31 = tpu.iota {dimensions = array<i32: 1>} : vector<2x128xi32>
      %cst_17 = arith.constant dense<0xFF800000> : vector<2xf32>
      %32 = vector.multi_reduction <maximumf>, %30, %cst_17 [1] : vector<2x128xf32> to vector<2xf32>
      %33 = vector.shape_cast %32 : vector<2xf32> to vector<2x1xf32>
      %34 = vector.broadcast %33 : vector<2x1xf32> to vector<2x128xf32>
      %35 = arith.cmpf oeq, %30, %34 : vector<2x128xf32>
      %c128_i32 = arith.constant 128 : i32
      %36 = vector.broadcast %c128_i32 : i32 to vector<2x128xi32>
      %37 = arith.select %35, %31, %36 : vector<2x128xi1>, vector<2x128xi32>
      %cst_18 = arith.constant dense<2147483647> : vector<2xi32>
      %38 = vector.multi_reduction <minsi>, %37, %cst_18 [1] : vector<2x128xi32> to vector<2xi32>
      %39 = vector.shape_cast %38 : vector<2xi32> to vector<2x1xi32>
      %40 = vector.broadcast %39 : vector<2x1xi32> to vector<2x128xi32>
      %41 = arith.cmpi eq, %31, %40 : vector<2x128xi32>
      %cst_19 = arith.constant 1.500000e+01 : f32
      %42 = vector.broadcast %cst_19 : f32 to vector<2x1xf32>
      %43 = arith.mulf %33, %42 : vector<2x1xf32>
      %44 = math.floor %43 : vector<2x1xf32>
      %45 = arith.fptosi %44 : vector<2x1xf32> to vector<2x1xi32>
      %c0_i32_20 = arith.constant 0 : i32
      %c14_i32 = arith.constant 14 : i32
      %46 = vector.broadcast %c0_i32_20 : i32 to vector<2x1xi32>
      %47 = arith.maxsi %46, %45 : vector<2x1xi32>
      %48 = vector.broadcast %c14_i32 : i32 to vector<2x1xi32>
      %49 = arith.minsi %48, %47 : vector<2x1xi32>
      %50 = tpu.iota {dimensions = array<i32: 1>} : vector<2x128xi32>
      %51 = vector.broadcast %49 : vector<2x1xi32> to vector<2x128xi32>
      %52 = arith.cmpi eq, %50, %51 : vector<2x128xi32>
      %c0_21 = arith.constant 0 : index
      %c0_22 = arith.constant 0 : index
      %53 = vector.load %arg5[%c0_21, %c0_22] : memref<1x128xf32, #tpu.memory_space<vmem>>, vector<1x128xf32>
      %cst_23 = arith.constant 0.000000e+00 : f32
      %54 = vector.shape_cast %53 : vector<1x128xf32> to vector<1x128xf32>
      %55 = vector.broadcast %54 : vector<1x128xf32> to vector<2x128xf32>
      %56 = vector.broadcast %cst_23 : f32 to vector<2x128xf32>
      %57 = arith.select %52, %55, %56 : vector<2x128xi1>, vector<2x128xf32>
      %cst_24 = arith.constant dense<0.000000e+00> : vector<2xf32>
      %58 = vector.multi_reduction <add>, %57, %cst_24 [1] : vector<2x128xf32> to vector<2xf32>
      %59 = vector.shape_cast %58 : vector<2xf32> to vector<2x1xf32>
      %cst_25 = arith.constant -1.000000e+00 : f32
      %60 = vector.broadcast %cst_25 : f32 to vector<2x1xf32>
      %61 = arith.cmpf one, %59, %60 : vector<2x1xf32>
      %62 = arith.select %61, %59, %33 : vector<2x1xi1>, vector<2x1xf32>
      %cst_26 = arith.constant 0.000000e+00 : f32
      %63 = vector.broadcast %cst_26 : f32 to vector<2x128xf32>
      %64 = arith.select %41, %63, %30 : vector<2x128xi1>, vector<2x128xf32>
      %cst_27 = arith.constant dense<0.000000e+00> : vector<2xf32>
      %65 = vector.multi_reduction <add>, %64, %cst_27 [1] : vector<2x128xf32> to vector<2xf32>
      %66 = vector.shape_cast %65 : vector<2xf32> to vector<2x1xf32>
      %cst_28 = arith.constant 1.000000e-30 : f32
      %67 = vector.broadcast %cst_28 : f32 to vector<2x1xf32>
      %68 = arith.maximumf %66, %67 : vector<2x1xf32>
      %cst_29 = arith.constant 1.000000e+00 : f32
      %69 = vector.broadcast %cst_29 : f32 to vector<2x1xf32>
      %70 = arith.subf %69, %62 : vector<2x1xf32>
      %71 = vector.broadcast %70 : vector<2x1xf32> to vector<2x128xf32>
      %72 = arith.mulf %71, %64 : vector<2x128xf32>
      %73 = tpu.reciprocal %68 {approx = true} : vector<2x1xf32> -> vector<2x1xf32>
      %74 = arith.mulf %68, %73 : vector<2x1xf32>
      %cst_30 = arith.constant 2.000000e+00 : f32
      %75 = vector.broadcast %cst_30 : f32 to vector<2x1xf32>
      %76 = arith.subf %75, %74 : vector<2x1xf32>
      %77 = arith.mulf %73, %76 : vector<2x1xf32>
      %78 = vector.broadcast %77 : vector<2x1xf32> to vector<2x128xf32>
      %79 = arith.mulf %72, %78 : vector<2x128xf32>
      %80 = vector.shape_cast %62 : vector<2x1xf32> to vector<2x1xf32>
      %81 = vector.broadcast %80 : vector<2x1xf32> to vector<2x128xf32>
      %82 = arith.select %41, %81, %79 : vector<2x128xi1>, vector<2x128xf32>
      %cst_31 = arith.constant dense<0.000000e+00> : vector<2xf32>
      %83 = vector.multi_reduction <add>, %82, %cst_31 [1] : vector<2x128xf32> to vector<2xf32>
      %84 = vector.shape_cast %83 : vector<2xf32> to vector<2x1xf32>
      %85 = tpu.reciprocal %84 {approx = true} : vector<2x1xf32> -> vector<2x1xf32>
      %86 = arith.mulf %84, %85 : vector<2x1xf32>
      %cst_32 = arith.constant 2.000000e+00 : f32
      %87 = vector.broadcast %cst_32 : f32 to vector<2x1xf32>
      %88 = arith.subf %87, %86 : vector<2x1xf32>
      %89 = arith.mulf %85, %88 : vector<2x1xf32>
      %90 = vector.broadcast %89 : vector<2x1xf32> to vector<2x128xf32>
      %91 = arith.mulf %82, %90 : vector<2x128xf32>
      %c0_33 = arith.constant 0 : index
      %c0_34 = arith.constant 0 : index
      %92 = vector.load %arg6[%c0_33, %c0_34] : memref<2x256xf32, #tpu.memory_space<vmem>>, vector<2x128xf32>
      tpu.vector_store %arg6[%c0_33, %c0_34], %91 {strides = array<i32>} : memref<2x256xf32, #tpu.memory_space<vmem>>, vector<2x128xf32>,
      %c0_i32_35 = arith.constant 0 : i32
      %93 = vector.broadcast %c0_i32_35 : i32 to vector<2x128xi32>
      %94 = arith.cmpi eq, %31, %93 : vector<2x128xi32>
      %95 = arith.extui %61 : vector<2x1xi1> to vector<2x1xi32>
      %96 = arith.sitofp %95 : vector<2x1xi32> to vector<2x1xf32>
      %c1_i32 = arith.constant 1 : i32
      %97 = vector.broadcast %c1_i32 : i32 to vector<2x128xi32>
      %98 = arith.cmpi eq, %31, %97 : vector<2x128xi32>
      %99 = arith.sitofp %39 : vector<2x1xi32> to vector<2x1xf32>
      %cst_36 = arith.constant 0.000000e+00 : f32
      %100 = vector.shape_cast %99 : vector<2x1xf32> to vector<2x1xf32>
      %101 = vector.broadcast %100 : vector<2x1xf32> to vector<2x128xf32>
      %102 = vector.broadcast %cst_36 : f32 to vector<2x128xf32>
      %103 = arith.select %98, %101, %102 : vector<2x128xi1>, vector<2x128xf32>
      %104 = vector.shape_cast %96 : vector<2x1xf32> to vector<2x1xf32>
      %105 = vector.broadcast %104 : vector<2x1xf32> to vector<2x128xf32>
      %106 = arith.select %94, %105, %103 : vector<2x128xi1>, vector<2x128xf32>
      %c0_37 = arith.constant 0 : index
      %c128 = arith.constant 128 : index
      %107 = vector.load %arg6[%c0_37, %c128] : memref<2x256xf32, #tpu.memory_space<vmem>>, vector<2x128xf32>
      tpu.vector_store %arg6[%c0_37, %c128], %106 {strides = array<i32>} : memref<2x256xf32, #tpu.memory_space<vmem>>, vector<2x128xf32>,
    } else {
    }
    return
  }
  func.func @transform_0(%arg0: i32, %arg1: i32) -> (i32, i32) {
    %c0_i32 = arith.constant 0 : i32
    return %arg0, %arg1 : i32, i32
  }
  func.func @transform_1(%arg0: i32, %arg1: i32) -> (i32, i32) {
    %c0_i32 = arith.constant 0 : i32
    %c0_i32_0 = arith.constant 0 : i32
    return %arg1, %c0_i32 : i32, i32
  }
  func.func @transform_2(%arg0: i32, %arg1: i32) -> (i32, i32) {
    %c0_i32 = arith.constant 0 : i32
    %c0_i32_0 = arith.constant 0 : i32
    %c0_i32_1 = arith.constant 0 : i32
    return %c0_i32, %c0_i32_0 : i32, i32
  }
  func.func @transform_3(%arg0: i32, %arg1: i32) -> (i32, i32) {
    %c0_i32 = arith.constant 0 : i32
    %c0_i32_0 = arith.constant 0 : i32
    %c0_i32_1 = arith.constant 0 : i32
    return %c0_i32, %c0_i32_0 : i32, i32
  }
  func.func @transform_4(%arg0: i32, %arg1: i32) -> (i32, i32) {
    %c0_i32 = arith.constant 0 : i32
    %c0_i32_0 = arith.constant 0 : i32
    return %arg0, %c0_i32 : i32, i32
  }
}

</mosaic_0001>

<llo_original>
// kernel: tpu_custom_call.1
$region0: #{tpu_custom_call.1}
  #allocation0 [shape = 'u32[]', space=smem, size = 0x4, offset = 0x4, fixed_abs, tag = 'smem constant byte address 0x4 - core index']
  #allocation1 [shape = 'u32[72,128]{1,0:T(1,128)}', space=vmem, size = 0x9000, scoped, tag = 'internal scratch']
  #allocation2 [shape = 'f32[2,128]{1,0:T(2,128)}', space=vmem, size = 0x400, scoped, tag = 'scratch operand']
  %s0 = inlined_call_operand.hbm [shape: f32[2,1024], index: 0, kind: input, shape index: {}]
  %s1 = inlined_call_operand.hbm [shape: bf16[1024,128], index: 1, kind: input, shape index: {}]
  %s2 = inlined_call_operand.vmem [shape: f32[1,128], index: 2, kind: input, shape index: {}]
  %s3 = inlined_call_operand.vmem [shape: f32[1,128], index: 3, kind: input, shape index: {}]
  %s4 = inlined_call_operand.hbm [shape: f32[2,256], index: 4, kind: output, shape index: {}]
  %s5 = sld [smem:[#allocation0]]
  $region42: #{tpu_custom_call.1} parent=0
    _
  %s7 = ssub.s32 1, %s5
  %s8 = scalar_select 0, %s7, %s5
  $region1: #{tpu_custom_call.1} parent=0
    #allocation3 [shape = 'u8[8192]{0}', space=vmem, size = 0x2000, scoped, tag = 'input window, operand 0, single buffered']
    #allocation4 [shape = 's32[1]{0}', space=sflag, size = 0x4, scoped, tag = 'scoped memory for tpu_custom_call.1']
    #allocation5 [shape = 's32[1]{0}', space=sflag, size = 0x4, scoped, tag = 'scoped memory for tpu_custom_call.1']
    #allocation6 [shape = 'u8[262144]{0}', space=vmem, size = 0x40000, scoped, tag = 'input window, operand 1, single buffered']
    #allocation7 [shape = 's32[1]{0}', space=sflag, size = 0x4, scoped, tag = 'scoped memory for tpu_custom_call.1']
    #allocation8 [shape = 'u8[2048]{0}', space=vmem, size = 0x800, scoped, tag = 'output window, operand 0, single buffered']
    %9 = vsyncpa [#allocation4], 0
    %10 = vsyncpa [#allocation7], 0
    %11 = vsyncpa [#allocation5], 0
    // Predicated region
    $region2: #{tpu_custom_call.1} parent=1 // pred_check
      _
    $region3: #{tpu_custom_call.1} parent=1 // pred_check_branch
      %13 = sbr.rel (0) target = $region5
    $region4: #{tpu_custom_call.1} parent=1 // pred_region
      %15 = vsyncadd [#allocation4], 0
      %s17 = sshll.u32 %s0, 4
      %s18 = int_to_ptr.hbm [resolvable:$true] %s17
      %s19 = sshll.u32 [#allocation3], 4
      %s20 = int_to_ptr.vmem [resolvable:$true] %s19
      %22 = dma.hbm_to_vmem [thread:$0]  %s18, 256, %s20, [#allocation4]
    $region5: #{tpu_custom_call.1} parent=1 // pred_fallthru
      _
    // Predicated region
    $region6: #{tpu_custom_call.1} parent=1 // pred_check
      _
    $region7: #{tpu_custom_call.1} parent=1 // pred_check_branch
      %24 = sbr.rel (0) target = $region9
    $region8: #{tpu_custom_call.1} parent=1 // pred_region
      %26 = vsyncadd [#allocation7], 0
      %s27 = sshll.u32 %s1, 4
      %s28 = int_to_ptr.hbm [resolvable:$true] %s27
      %s29 = sshll.u32 [#allocation6], 4
      %s30 = int_to_ptr.vmem [resolvable:$true] %s29
      %35 = dma.hbm_to_vmem [thread:$0]  %s28, 8192, %s30, [#allocation7], 64, 64, 4
    $region9: #{tpu_custom_call.1} parent=1 // pred_fallthru
      _
    // Predicated region
    $region10: #{tpu_custom_call.1} parent=1 // pred_check
      _
    $region11: #{tpu_custom_call.1} parent=1 // pred_check_branch
      %37 = sbr.rel (0) target = $region13
    $region12: #{tpu_custom_call.1} parent=1 // pred_region
      _
    $region13: #{tpu_custom_call.1} parent=1 // pred_fallthru
      _
    // Predicated region
    $region14: #{tpu_custom_call.1} parent=1 // pred_check
      _
    $region15: #{tpu_custom_call.1} parent=1 // pred_check_branch
      %39 = sbr.rel (0) target = $region17
    $region16: #{tpu_custom_call.1} parent=1 // pred_region
      _
    $region17: #{tpu_custom_call.1} parent=1 // pred_fallthru
      _
    // Predicated region
    $region18: #{tpu_custom_call.1} parent=1 // pred_check
      _
    $region19: #{tpu_custom_call.1} parent=1 // pred_check_branch
      %41 = sbr.rel (0) target = $region21
    $region20: #{tpu_custom_call.1} parent=1 // pred_region
      %43 = dma.done [#allocation4], 256
    $region21: #{tpu_custom_call.1} parent=1 // pred_fallthru
      _
    // Predicated region
    $region22: #{tpu_custom_call.1} parent=1 // pred_check
      _
    $region23: #{tpu_custom_call.1} parent=1 // pred_check_branch
      %45 = sbr.rel (0) target = $region25
    $region24: #{tpu_custom_call.1} parent=1 // pred_region
      %47 = dma.done [#allocation7], 8192
    $region25: #{tpu_custom_call.1} parent=1 // pred_fallthru
      _
    %p48 = scmp.eq.s32.totalorder 0, 0
    // Predicated region
    $region26: #{tpu_custom_call.1} parent=1 // pred_check
      %p49 = pneg %p48
    $region27: #{tpu_custom_call.1} parent=1 // pred_check_branch
      %51 = sbr.rel (%p49) target = $region29
    $region28: #{tpu_custom_call.1} parent=1 // pred_region
      %52 = vst [vmem:[#allocation2] sm:$0x3] 0.0
    $region29: #{tpu_custom_call.1} parent=1 // pred_fallthru
      _
    %v53 = vld [vmem:[#allocation3] sm:$0xff]
    %v54 = vld [vmem:[#allocation3 + $0x8] sm:$0xff]
    %57 = vst [vmem:[#allocation1] ss:$4 sm:$0xff] %v53
    %s58 = scalar_lea.vmem [#allocation1], 32
    %59 = vst [vmem:[%s58] ss:$4 sm:$0xff] %v54
    %v60 = vld.sshfl [vmem:[#allocation1] sm:$0xff pattern:$0x73625140]
    %v61 = vld.sshfl [vmem:[#allocation1 + $0x8] sm:$0xff pattern:$0x73625140]
    %v62 = vld.sshfl [vmem:[#allocation1 + $0x10] sm:$0xff pattern:$0x73625140]
    %v63 = vld.sshfl [vmem:[#allocation1 + $0x18] sm:$0xff pattern:$0x73625140]
    %v64 = vld.sshfl [vmem:[#allocation1 + $0x20] sm:$0xff pattern:$0x73625140]
    %v65 = vld.sshfl [vmem:[#allocation1 + $0x28] sm:$0xff pattern:$0x73625140]
    %v66 = vld.sshfl [vmem:[#allocation1 + $0x30] sm:$0xff pattern:$0x73625140]
    %v67 = vld.sshfl [vmem:[#allocation1 + $0x38] sm:$0xff pattern:$0x73625140]
    %v76 = vpack.c.bf16 %v60, %v60
    %v77 = vpack.c.bf16 %v61, %v61
    %v78 = vpack.c.bf16 %v62, %v62
    %v79 = vpack.c.bf16 %v63, %v63
    %v80 = vpack.c.bf16 %v64, %v64
    %v81 = vpack.c.bf16 %v65, %v65
    %v82 = vpack.c.bf16 %v66, %v66
    %v83 = vpack.c.bf16 %v67, %v67
    %v84 = vld [vmem:[#allocation2] sm:$0x3]
    %v85 = vld [vmem:[#allocation6] sm:$0xf]
    %v86 = vld [vmem:[#allocation6 + $0x4] sm:$0xf]
    %v87 = vld [vmem:[#allocation6 + $0x8] sm:$0xf]
    %v88 = vld [vmem:[#allocation6 + $0xc] sm:$0xf]
    %v89 = vld [vmem:[#allocation6 + $0x10] sm:$0xf]
    %v90 = vld [vmem:[#allocation6 + $0x14] sm:$0xf]
    %v91 = vld [vmem:[#allocation6 + $0x18] sm:$0xf]
    %v92 = vld [vmem:[#allocation6 + $0x1c] sm:$0xf]
    %v93 = vld [vmem:[#allocation6 + $0x20] sm:$0xf]
    %v94 = vld [vmem:[#allocation6 + $0x24] sm:$0xf]
    %v95 = vld [vmem:[#allocation6 + $0x28] sm:$0xf]
    %v96 = vld [vmem:[#allocation6 + $0x2c] sm:$0xf]
    %v97 = vld [vmem:[#allocation6 + $0x30] sm:$0xf]
    %v98 = vld [vmem:[#allocation6 + $0x34] sm:$0xf]
    %v99 = vld [vmem:[#allocation6 + $0x38] sm:$0xf]
    %v100 = vld [vmem:[#allocation6 + $0x3c] sm:$0xf]
    %v101 = vld [vmem:[#allocation6 + $0x40] sm:$0xf]
    %v102 = vld [vmem:[#allocation6 + $0x44] sm:$0xf]
    %v103 = vld [vmem:[#allocation6 + $0x48] sm:$0xf]
    %v104 = vld [vmem:[#allocation6 + $0x4c] sm:$0xf]
    %v105 = vld [vmem:[#allocation6 + $0x50] sm:$0xf]
    %v106 = vld [vmem:[#allocation6 + $0x54] sm:$0xf]
    %v107 = vld [vmem:[#allocation6 + $0x58] sm:$0xf]
    %v108 = vld [vmem:[#allocation6 + $0x5c] sm:$0xf]
    %v109 = vld [vmem:[#allocation6 + $0x60] sm:$0xf]
    %v110 = vld [vmem:[#allocation6 + $0x64] sm:$0xf]
    %v111 = vld [vmem:[#allocation6 + $0x68] sm:$0xf]
    %v112 = vld [vmem:[#allocation6 + $0x6c] sm:$0xf]
    %v113 = vld [vmem:[#allocation6 + $0x70] sm:$0xf]
    %v114 = vld [vmem:[#allocation6 + $0x74] sm:$0xf]
    %v115 = vld [vmem:[#allocation6 + $0x78] sm:$0xf]
    %v116 = vld [vmem:[#allocation6 + $0x7c] sm:$0xf]
    %v117 = vld [vmem:[#allocation6 + $0x80] sm:$0xf]
    %v118 = vld [vmem:[#allocation6 + $0x84] sm:$0xf]
    %v119 = vld [vmem:[#allocation6 + $0x88] sm:$0xf]
    %v120 = vld [vmem:[#allocation6 + $0x8c] sm:$0xf]
    %v121 = vld [vmem:[#allocation6 + $0x90] sm:$0xf]
    %v122 = vld [vmem:[#allocation6 + $0x94] sm:$0xf]
    %v123 = vld [vmem:[#allocation6 + $0x98] sm:$0xf]
    %v124 = vld [vmem:[#allocation6 + $0x9c] sm:$0xf]
    %v125 = vld [vmem:[#allocation6 + $0xa0] sm:$0xf]
    %v126 = vld [vmem:[#allocation6 + $0xa4] sm:$0xf]
    %v127 = vld [vmem:[#allocation6 + $0xa8] sm:$0xf]
    %v128 = vld [vmem:[#allocation6 + $0xac] sm:$0xf]
    %v129 = vld [vmem:[#allocation6 + $0xb0] sm:$0xf]
    %v130 = vld [vmem:[#allocation6 + $0xb4] sm:$0xf]
    %v131 = vld [vmem:[#allocation6 + $0xb8] sm:$0xf]
    %v132 = vld [vmem:[#allocation6 + $0xbc] sm:$0xf]
    %v133 = vld [vmem:[#allocation6 + $0xc0] sm:$0xf]
    %v134 = vld [vmem:[#allocation6 + $0xc4] sm:$0xf]
    %v135 = vld [vmem:[#allocation6 + $0xc8] sm:$0xf]
    %v136 = vld [vmem:[#allocation6 + $0xcc] sm:$0xf]
    %v137 = vld [vmem:[#allocation6 + $0xd0] sm:$0xf]
    %v138 = vld [vmem:[#allocation6 + $0xd4] sm:$0xf]
    %v139 = vld [vmem:[#allocation6 + $0xd8] sm:$0xf]
    %v140 = vld [vmem:[#allocation6 + $0xdc] sm:$0xf]
    %v141 = vld [vmem:[#allocation6 + $0xe0] sm:$0xf]
    %v142 = vld [vmem:[#allocation6 + $0xe4] sm:$0xf]
    %v143 = vld [vmem:[#allocation6 + $0xe8] sm:$0xf]
    %v144 = vld [vmem:[#allocation6 + $0xec] sm:$0xf]
    %v145 = vld [vmem:[#allocation6 + $0xf0] sm:$0xf]
    %v146 = vld [vmem:[#allocation6 + $0xf4] sm:$0xf]
    %v147 = vld [vmem:[#allocation6 + $0xf8] sm:$0xf]
    %v148 = vld [vmem:[#allocation6 + $0xfc] sm:$0xf]
    %v149 = vld [vmem:[#allocation6 + $0x100] sm:$0xf]
    %v150 = vld [vmem:[#allocation6 + $0x104] sm:$0xf]
    %v151 = vld [vmem:[#allocation6 + $0x108] sm:$0xf]
    %v152 = vld [vmem:[#allocation6 + $0x10c] sm:$0xf]
    %v153 = vld [vmem:[#allocation6 + $0x110] sm:$0xf]
    %v154 = vld [vmem:[#allocation6 + $0x114] sm:$0xf]
    %v155 = vld [vmem:[#allocation6 + $0x118] sm:$0xf]
    %v156 = vld [vmem:[#allocation6 + $0x11c] sm:$0xf]
    %v157 = vld [vmem:[#allocation6 + $0x120] sm:$0xf]
    %v158 = vld [vmem:[#allocation6 + $0x124] sm:$0xf]
    %v159 = vld [vmem:[#allocation6 + $0x128] sm:$0xf]
    %v160 = vld [vmem:[#allocation6 + $0x12c] sm:$0xf]
    %v161 = vld [vmem:[#allocation6 + $0x130] sm:$0xf]
    %v162 = vld [vmem:[#allocation6 + $0x134] sm:$0xf]
    %v163 = vld [vmem:[#allocation6 + $0x138] sm:$0xf]
    %v164 = vld [vmem:[#allocation6 + $0x13c] sm:$0xf]
    %v165 = vld [vmem:[#allocation6 + $0x140] sm:$0xf]
    %v166 = vld [vmem:[#allocation6 + $0x144] sm:$0xf]
    %v167 = vld [vmem:[#allocation6 + $0x148] sm:$0xf]
    %v168 = vld [vmem:[#allocation6 + $0x14c] sm:$0xf]
    %v169 = vld [vmem:[#allocation6 + $0x150] sm:$0xf]
    %v170 = vld [vmem:[#allocation6 + $0x154] sm:$0xf]
    %v171 = vld [vmem:[#allocation6 + $0x158] sm:$0xf]
    %v172 = vld [vmem:[#allocation6 + $0x15c] sm:$0xf]
    %v173 = vld [vmem:[#allocation6 + $0x160] sm:$0xf]
    %v174 = vld [vmem:[#allocation6 + $0x164] sm:$0xf]
    %v175 = vld [vmem:[#allocation6 + $0x168] sm:$0xf]
    %v176 = vld [vmem:[#allocation6 + $0x16c] sm:$0xf]
    %v177 = vld [vmem:[#allocation6 + $0x170] sm:$0xf]
    %v178 = vld [vmem:[#allocation6 + $0x174] sm:$0xf]
    %v179 = vld [vmem:[#allocation6 + $0x178] sm:$0xf]
    %v180 = vld [vmem:[#allocation6 + $0x17c] sm:$0xf]
    %v181 = vld [vmem:[#allocation6 + $0x180] sm:$0xf]
    %v182 = vld [vmem:[#allocation6 + $0x184] sm:$0xf]
    %v183 = vld [vmem:[#allocation6 + $0x188] sm:$0xf]
    %v184 = vld [vmem:[#allocation6 + $0x18c] sm:$0xf]
    %v185 = vld [vmem:[#allocation6 + $0x190] sm:$0xf]
    %v186 = vld [vmem:[#allocation6 + $0x194] sm:$0xf]
    %v187 = vld [vmem:[#allocation6 + $0x198] sm:$0xf]
    %v188 = vld [vmem:[#allocation6 + $0x19c] sm:$0xf]
    %v189 = vld [vmem:[#allocation6 + $0x1a0] sm:$0xf]
    %v190 = vld [vmem:[#allocation6 + $0x1a4] sm:$0xf]
    %v191 = vld [vmem:[#allocation6 + $0x1a8] sm:$0xf]
    %v192 = vld [vmem:[#allocation6 + $0x1ac] sm:$0xf]
    %v193 = vld [vmem:[#allocation6 + $0x1b0] sm:$0xf]
    %v194 = vld [vmem:[#allocation6 + $0x1b4] sm:$0xf]
    %v195 = vld [vmem:[#allocation6 + $0x1b8] sm:$0xf]
    %v196 = vld [vmem:[#allocation6 + $0x1bc] sm:$0xf]
    %v197 = vld [vmem:[#allocation6 + $0x1c0] sm:$0xf]
    %v198 = vld [vmem:[#allocation6 + $0x1c4] sm:$0xf]
    %v199 = vld [vmem:[#allocation6 + $0x1c8] sm:$0xf]
    %v200 = vld [vmem:[#allocation6 + $0x1cc] sm:$0xf]
    %v201 = vld [vmem:[#allocation6 + $0x1d0] sm:$0xf]
    %v202 = vld [vmem:[#allocation6 + $0x1d4] sm:$0xf]
    %v203 = vld [vmem:[#allocation6 + $0x1d8] sm:$0xf]
    %v204 = vld [vmem:[#allocation6 + $0x1dc] sm:$0xf]
    %v205 = vld [vmem:[#allocation6 + $0x1e0] sm:$0xf]
    %v206 = vld [vmem:[#allocation6 + $0x1e4] sm:$0xf]
    %v207 = vld [vmem:[#allocation6 + $0x1e8] sm:$0xf]
    %v208 = vld [vmem:[#allocation6 + $0x1ec] sm:$0xf]
    %v209 = vld [vmem:[#allocation6 + $0x1f0] sm:$0xf]
    %v210 = vld [vmem:[#allocation6 + $0x1f4] sm:$0xf]
    %v211 = vld [vmem:[#allocation6 + $0x1f8] sm:$0xf]
    %v212 = vld [vmem:[#allocation6 + $0x1fc] sm:$0xf]
    %v341 = vunpack.c.l.b16 %v85
    %v342 = vunpack.c.l.b16 %v86
    %v343 = vunpack.c.l.b16 %v87
    %v344 = vunpack.c.l.b16 %v88
    %v345 = vunpack.c.l.b16 %v89
    %v346 = vunpack.c.l.b16 %v90
    %v347 = vunpack.c.l.b16 %v91
    %v348 = vunpack.c.l.b16 %v92
    %v349 = vunpack.c.l.b16 %v93
    %v350 = vunpack.c.l.b16 %v94
    %v351 = vunpack.c.l.b16 %v95
    %v352 = vunpack.c.l.b16 %v96
    %v353 = vunpack.c.l.b16 %v97
    %v354 = vunpack.c.l.b16 %v98
    %v355 = vunpack.c.l.b16 %v99
    %v356 = vunpack.c.l.b16 %v100
    %v357 = vunpack.c.l.b16 %v101
    %v358 = vunpack.c.l.b16 %v102
    %v359 = vunpack.c.l.b16 %v103
    %v360 = vunpack.c.l.b16 %v104
    %v361 = vunpack.c.l.b16 %v105
    %v362 = vunpack.c.l.b16 %v106
    %v363 = vunpack.c.l.b16 %v107
    %v364 = vunpack.c.l.b16 %v108
    %v365 = vunpack.c.l.b16 %v109
    %v366 = vunpack.c.l.b16 %v110
    %v367 = vunpack.c.l.b16 %v111
    %v368 = vunpack.c.l.b16 %v112
    %v369 = vunpack.c.l.b16 %v113
    %v370 = vunpack.c.l.b16 %v114
    %v371 = vunpack.c.l.b16 %v115
    %v372 = vunpack.c.l.b16 %v116
    %v373 = vunpack.c.l.b16 %v117
    %v374 = vunpack.c.l.b16 %v118
    %v375 = vunpack.c.l.b16 %v119
    %v376 = vunpack.c.l.b16 %v120
    %v377 = vunpack.c.l.b16 %v121
    %v378 = vunpack.c.l.b16 %v122
    %v379 = vunpack.c.l.b16 %v123
    %v380 = vunpack.c.l.b16 %v124
    %v381 = vunpack.c.l.b16 %v125
    %v382 = vunpack.c.l.b16 %v126
    %v383 = vunpack.c.l.b16 %v127
    %v384 = vunpack.c.l.b16 %v128
    %v385 = vunpack.c.l.b16 %v129
    %v386 = vunpack.c.l.b16 %v130
    %v387 = vunpack.c.l.b16 %v131
    %v388 = vunpack.c.l.b16 %v132
    %v389 = vunpack.c.l.b16 %v133
    %v390 = vunpack.c.l.b16 %v134
    %v391 = vunpack.c.l.b16 %v135
    %v392 = vunpack.c.l.b16 %v136
    %v393 = vunpack.c.l.b16 %v137
    %v394 = vunpack.c.l.b16 %v138
    %v395 = vunpack.c.l.b16 %v139
    %v396 = vunpack.c.l.b16 %v140
    %v397 = vunpack.c.l.b16 %v141
    %v398 = vunpack.c.l.b16 %v142
    %v399 = vunpack.c.l.b16 %v143
    %v400 = vunpack.c.l.b16 %v144
    %v401 = vunpack.c.l.b16 %v145
    %v402 = vunpack.c.l.b16 %v146
    %v403 = vunpack.c.l.b16 %v147
    %v404 = vunpack.c.l.b16 %v148
    %v405 = vunpack.c.l.b16 %v149
    %v406 = vunpack.c.l.b16 %v150
    %v407 = vunpack.c.l.b16 %v151
    %v408 = vunpack.c.l.b16 %v152
    %v409 = vunpack.c.l.b16 %v153
    %v410 = vunpack.c.l.b16 %v154
    %v411 = vunpack.c.l.b16 %v155
    %v412 = vunpack.c.l.b16 %v156
    %v413 = vunpack.c.l.b16 %v157
    %v414 = vunpack.c.l.b16 %v158
    %v415 = vunpack.c.l.b16 %v159
    %v416 = vunpack.c.l.b16 %v160
    %v417 = vunpack.c.l.b16 %v161
    %v418 = vunpack.c.l.b16 %v162
    %v419 = vunpack.c.l.b16 %v163
    %v420 = vunpack.c.l.b16 %v164
    %v421 = vunpack.c.l.b16 %v165
    %v422 = vunpack.c.l.b16 %v166
    %v423 = vunpack.c.l.b16 %v167
    %v424 = vunpack.c.l.b16 %v168
    %v425 = vunpack.c.l.b16 %v169
    %v426 = vunpack.c.l.b16 %v170
    %v427 = vunpack.c.l.b16 %v171
    %v428 = vunpack.c.l.b16 %v172
    %v429 = vunpack.c.l.b16 %v173
    %v430 = vunpack.c.l.b16 %v174
    %v431 = vunpack.c.l.b16 %v175
    %v432 = vunpack.c.l.b16 %v176
    %v433 = vunpack.c.l.b16 %v177
    %v434 = vunpack.c.l.b16 %v178
    %v435 = vunpack.c.l.b16 %v179
    %v436 = vunpack.c.l.b16 %v180
    %v437 = vunpack.c.l.b16 %v181
    %v438 = vunpack.c.l.b16 %v182
    %v439 = vunpack.c.l.b16 %v183
    %v440 = vunpack.c.l.b16 %v184
    %v441 = vunpack.c.l.b16 %v185
    %v442 = vunpack.c.l.b16 %v186
    %v443 = vunpack.c.l.b16 %v187
    %v444 = vunpack.c.l.b16 %v188
    %v445 = vunpack.c.l.b16 %v189
    %v446 = vunpack.c.l.b16 %v190
    %v447 = vunpack.c.l.b16 %v191
    %v448 = vunpack.c.l.b16 %v192
    %v449 = vunpack.c.l.b16 %v193
    %v450 = vunpack.c.l.b16 %v194
    %v451 = vunpack.c.l.b16 %v195
    %v452 = vunpack.c.l.b16 %v196
    %v453 = vunpack.c.l.b16 %v197
    %v454 = vunpack.c.l.b16 %v198
    %v455 = vunpack.c.l.b16 %v199
    %v456 = vunpack.c.l.b16 %v200
    %v457 = vunpack.c.l.b16 %v201
    %v458 = vunpack.c.l.b16 %v202
    %v459 = vunpack.c.l.b16 %v203
    %v460 = vunpack.c.l.b16 %v204
    %v461 = vunpack.c.l.b16 %v205
    %v462 = vunpack.c.l.b16 %v206
    %v463 = vunpack.c.l.b16 %v207
    %v464 = vunpack.c.l.b16 %v208
    %v465 = vunpack.c.l.b16 %v209
    %v466 = vunpack.c.l.b16 %v210
    %v467 = vunpack.c.l.b16 %v211
    %v468 = vunpack.c.l.b16 %v212
    %v469 = vpack.c.b16 %v342, %v341
    %v470 = vpack.c.b16 %v344, %v343
    %v471 = vpack.c.b16 %v346, %v345
    %v472 = vpack.c.b16 %v348, %v347
    %v473 = vpack.c.b16 %v350, %v349
    %v474 = vpack.c.b16 %v352, %v351
    %v475 = vpack.c.b16 %v354, %v353
    %v476 = vpack.c.b16 %v356, %v355
    %v477 = vpack.c.b16 %v358, %v357
    %v478 = vpack.c.b16 %v360, %v359
    %v479 = vpack.c.b16 %v362, %v361
    %v480 = vpack.c.b16 %v364, %v363
    %v481 = vpack.c.b16 %v366, %v365
    %v482 = vpack.c.b16 %v368, %v367
    %v483 = vpack.c.b16 %v370, %v369
    %v484 = vpack.c.b16 %v372, %v371
    %v485 = vpack.c.b16 %v374, %v373
    %v486 = vpack.c.b16 %v376, %v375
    %v487 = vpack.c.b16 %v378, %v377
    %v488 = vpack.c.b16 %v380, %v379
    %v489 = vpack.c.b16 %v382, %v381
    %v490 = vpack.c.b16 %v384, %v383
    %v491 = vpack.c.b16 %v386, %v385
    %v492 = vpack.c.b16 %v388, %v387
    %v493 = vpack.c.b16 %v390, %v389
    %v494 = vpack.c.b16 %v392, %v391
    %v495 = vpack.c.b16 %v394, %v393
    %v496 = vpack.c.b16 %v396, %v395
    %v497 = vpack.c.b16 %v398, %v397
    %v498 = vpack.c.b16 %v400, %v399
    %v499 = vpack.c.b16 %v402, %v401
    %v500 = vpack.c.b16 %v404, %v403
    %v501 = vpack.c.b16 %v406, %v405
    %v502 = vpack.c.b16 %v408, %v407
    %v503 = vpack.c.b16 %v410, %v409
    %v504 = vpack.c.b16 %v412, %v411
    %v505 = vpack.c.b16 %v414, %v413
    %v506 = vpack.c.b16 %v416, %v415
    %v507 = vpack.c.b16 %v418, %v417
    %v508 = vpack.c.b16 %v420, %v419
    %v509 = vpack.c.b16 %v422, %v421
    %v510 = vpack.c.b16 %v424, %v423
    %v511 = vpack.c.b16 %v426, %v425
    %v512 = vpack.c.b16 %v428, %v427
    %v513 = vpack.c.b16 %v430, %v429
    %v514 = vpack.c.b16 %v432, %v431
    %v515 = vpack.c.b16 %v434, %v433
    %v516 = vpack.c.b16 %v436, %v435
    %v517 = vpack.c.b16 %v438, %v437
    %v518 = vpack.c.b16 %v440, %v439
    %v519 = vpack.c.b16 %v442, %v441
    %v520 = vpack.c.b16 %v444, %v443
    %v521 = vpack.c.b16 %v446, %v445
    %v522 = vpack.c.b16 %v448, %v447
    %v523 = vpack.c.b16 %v450, %v449
    %v524 = vpack.c.b16 %v452, %v451
    %v525 = vpack.c.b16 %v454, %v453
    %v526 = vpack.c.b16 %v456, %v455
    %v527 = vpack.c.b16 %v458, %v457
    %v528 = vpack.c.b16 %v460, %v459
    %v529 = vpack.c.b16 %v462, %v461
    %v530 = vpack.c.b16 %v464, %v463
    %v531 = vpack.c.b16 %v466, %v465
    %v532 = vpack.c.b16 %v468, %v467
    %597 = vmatpush.bf16.msra.mxu0 %v476
    %598 = vmatpush.bf16.msra.mxu0 %v475
    %599 = vmatpush.bf16.msra.mxu0 %v474
    %600 = vmatpush.bf16.msra.mxu0 %v473
    %601 = vmatpush.bf16.msra.mxu0 %v472
    %602 = vmatpush.bf16.msra.mxu0 %v471
    %603 = vmatpush.bf16.msra.mxu0 %v470
    %604 = vmatpush.bf16.msra.mxu0 %v469
    %605 = vmatmul.bf16.gmra.mxu0 %v76
    %v606 = vpop.f32.mrf.mxu0
    %v607 = vadd.f32 0.0, %v606
    %v608 = vpop.f32.mrf.mxu0
    %609 = vdwg.mxu0
    %610 = vmatpush.bf16.msra.mxu0 %v484
    %611 = vmatpush.bf16.msra.mxu0 %v483
    %612 = vmatpush.bf16.msra.mxu0 %v482
    %613 = vmatpush.bf16.msra.mxu0 %v481
    %614 = vmatpush.bf16.msra.mxu0 %v480
    %615 = vmatpush.bf16.msra.mxu0 %v479
    %616 = vmatpush.bf16.msra.mxu0 %v478
    %617 = vmatpush.bf16.msra.mxu0 %v477
    %618 = vmatmul.bf16.gmra.mxu0 %v77
    %v619 = vpop.f32.mrf.mxu0
    %v620 = vadd.f32 %v607, %v619
    %v621 = vpop.f32.mrf.mxu0
    %622 = vdwg.mxu0
    %623 = vmatpush.bf16.msra.mxu0 %v492
    %624 = vmatpush.bf16.msra.mxu0 %v491
    %625 = vmatpush.bf16.msra.mxu0 %v490
    %626 = vmatpush.bf16.msra.mxu0 %v489
    %627 = vmatpush.bf16.msra.mxu0 %v488
    %628 = vmatpush.bf16.msra.mxu0 %v487
    %629 = vmatpush.bf16.msra.mxu0 %v486
    %630 = vmatpush.bf16.msra.mxu0 %v485
    %631 = vmatmul.bf16.gmra.mxu0 %v78
    %v632 = vpop.f32.mrf.mxu0
    %v633 = vadd.f32 %v620, %v632
    %v634 = vpop.f32.mrf.mxu0
    %635 = vdwg.mxu0
    %636 = vmatpush.bf16.msra.mxu0 %v500
    %637 = vmatpush.bf16.msra.mxu0 %v499
    %638 = vmatpush.bf16.msra.mxu0 %v498
    %639 = vmatpush.bf16.msra.mxu0 %v497
    %640 = vmatpush.bf16.msra.mxu0 %v496
    %641 = vmatpush.bf16.msra.mxu0 %v495
    %642 = vmatpush.bf16.msra.mxu0 %v494
    %643 = vmatpush.bf16.msra.mxu0 %v493
    %644 = vmatmul.bf16.gmra.mxu0 %v79
    %v645 = vpop.f32.mrf.mxu0
    %v646 = vadd.f32 %v633, %v645
    %v647 = vpop.f32.mrf.mxu0
    %648 = vdwg.mxu0
    %649 = vmatpush.bf16.msra.mxu0 %v508
    %650 = vmatpush.bf16.msra.mxu0 %v507
    %651 = vmatpush.bf16.msra.mxu0 %v506
    %652 = vmatpush.bf16.msra.mxu0 %v505
    %653 = vmatpush.bf16.msra.mxu0 %v504
    %654 = vmatpush.bf16.msra.mxu0 %v503
    %655 = vmatpush.bf16.msra.mxu0 %v502
    %656 = vmatpush.bf16.msra.mxu0 %v501
    %657 = vmatmul.bf16.gmra.mxu0 %v80
    %v658 = vpop.f32.mrf.mxu0
    %v659 = vadd.f32 %v646, %v658
    %v660 = vpop.f32.mrf.mxu0
    %661 = vdwg.mxu0
    %662 = vmatpush.bf16.msra.mxu0 %v516
    %663 = vmatpush.bf16.msra.mxu0 %v515
    %664 = vmatpush.bf16.msra.mxu0 %v514
    %665 = vmatpush.bf16.msra.mxu0 %v513
    %666 = vmatpush.bf16.msra.mxu0 %v512
    %667 = vmatpush.bf16.msra.mxu0 %v511
    %668 = vmatpush.bf16.msra.mxu0 %v510
    %669 = vmatpush.bf16.msra.mxu0 %v509
    %670 = vmatmul.bf16.gmra.mxu0 %v81
    %v671 = vpop.f32.mrf.mxu0
    %v672 = vadd.f32 %v659, %v671
    %v673 = vpop.f32.mrf.mxu0
    %674 = vdwg.mxu0
    %675 = vmatpush.bf16.msra.mxu0 %v524
    %676 = vmatpush.bf16.msra.mxu0 %v523
    %677 = vmatpush.bf16.msra.mxu0 %v522
    %678 = vmatpush.bf16.msra.mxu0 %v521
    %679 = vmatpush.bf16.msra.mxu0 %v520
    %680 = vmatpush.bf16.msra.mxu0 %v519
    %681 = vmatpush.bf16.msra.mxu0 %v518
    %682 = vmatpush.bf16.msra.mxu0 %v517
    %683 = vmatmul.bf16.gmra.mxu0 %v82
    %v684 = vpop.f32.mrf.mxu0
    %v685 = vadd.f32 %v672, %v684
    %v686 = vpop.f32.mrf.mxu0
    %687 = vdwg.mxu0
    %688 = vmatpush.bf16.msra.mxu0 %v532
    %689 = vmatpush.bf16.msra.mxu0 %v531
    %690 = vmatpush.bf16.msra.mxu0 %v530
    %691 = vmatpush.bf16.msra.mxu0 %v529
    %692 = vmatpush.bf16.msra.mxu0 %v528
    %693 = vmatpush.bf16.msra.mxu0 %v527
    %694 = vmatpush.bf16.msra.mxu0 %v526
    %695 = vmatpush.bf16.msra.mxu0 %v525
    %696 = vmatmul.bf16.gmra.mxu0 %v83
    %v697 = vpop.f32.mrf.mxu0
    %v698 = vadd.f32 %v685, %v697
    %v699 = vpop.f32.mrf.mxu0
    %700 = vdwg.mxu0
    %v701 = vadd.f32 %v84, %v698
    %702 = vst [vmem:[#allocation2] sm:$0x3] %v701
    // Predicated region
    $region30: #{tpu_custom_call.1} parent=1 // pred_check
      %p703 = pneg %p48
    $region31: #{tpu_custom_call.1} parent=1 // pred_check_branch
      %705 = sbr.rel (%p703) target = $region33
    $region32: #{tpu_custom_call.1} parent=1 // pred_region
      %v706 = vld [vmem:[#allocation2] sm:$0x3]
      %v707 = vld [vmem:[%s2] sm:$0x1]
      %v709 = vperm.slane %v707, 0
      %v711 = vadd.f32 %v706, %v709
      %vm712 = vcmask 1041408
      %v713 = vsel %vm712, %v711, -inf
      %714 = vmax.xlane.f32.xlu0 %v713
      %v715 = vpop.xlane.xlu0 %714
      %v716 = vsub.f32 %v711, %v715
      %v717 = vmul.f32 %v716, 1.442695
      %v718 = vpow.pop %v717
      %v719 = vsel %vm712, %v718, 0.0
      %720 = vadd.xlane.f32.xlu0 %v719
      %v721 = vpop.xlane.xlu0 %720
      %v722 = vrcp.pop %v721
      %v723 = vmul.f32 %v721, %v722
      %v724 = vsub.f32 2.0, %v723
      %v725 = vmul.f32 %v722, %v724
      %v726 = vmul.f32 %v718, %v725
      %v727 = vlaneseq
      %v728 = vand.u32 %v727, 127
      %v729 = vsel %vm712, %v726, -inf
      %730 = vmax.xlane.f32.xlu0 %v729
      %v731 = vpop.xlane.xlu0 %730
      %vm732 = vcmp.eq.f32.partialorder %v726, %v731
      %v733 = vsel %vm732, %v728, 128
      %v734 = vsel %vm712, %v733, 2147483647
      %v735 = vand.u32 %v734, 65535
      %v736 = vshra.s32 %v734, 16
      %v737 = vcvt.s32.f32 %v735
      %v738 = vcvt.s32.f32 %v736
      %739 = vmin.xlane.f32.xlu0 %v738
      %v740 = vpop.xlane.xlu0 %739
      %vm741 = vcmp.eq.f32.partialorder %v738, %v740
      %v742 = vsel %vm741, %v737, inf
      %743 = vmin.xlane.f32.xlu0 %v742
      %v744 = vpop.xlane.xlu0 %743
      %v745 = vcvt.f32.s32 %v744
      %v746 = vcvt.f32.s32 %v740
      %v747 = vshll.u32 %v746, 16
      %v748 = vadd.s32 %v747, %v745
      %vm749 = vcmp.eq.s32.totalorder %v728, %v748
      %v750 = vmul.f32 %v731, 15.0
      %v751 = vfloor.f32 %v750
      %v752 = vcvt.f32.s32.to.zero.pseudo %v751
      %vm753 = vcmp.gt.s32.totalorder %v752, 0
      %v754 = vsel %vm753, %v752, 0
      %vm755 = vcmp.lt.s32.totalorder %v754, 14
      %v756 = vsel %vm755, %v754, 14
      %vm757 = vcmp.eq.s32.totalorder %v728, %v756
      %v758 = vld [vmem:[%s3] sm:$0x1]
      %v760 = vperm.slane %v758, 0
      %v762 = vsel %vm757, %v760, 0.0
      %v763 = vsel %vm712, %v762, 0.0
      %764 = vadd.xlane.f32.xlu0 %v763
      %v765 = vpop.xlane.xlu0 %764
      %vm766 = vcmp.ne.f32.partialorder %v765, -1.0
      %v767 = vsel %vm766, %v765, %v731
      %v768 = vsel %vm749, 0.0, %v726
      %v769 = vsel %vm712, %v768, 0.0
      %770 = vadd.xlane.f32.xlu0 %v769
      %v771 = vpop.xlane.xlu0 %770
      %v772 = vmax.f32 %v771, 1e-30
      %v773 = vsub.f32 1.0, %v767
      %v774 = vmul.f32 %v773, %v768
      %v775 = vrcp.pop %v772
      %v776 = vmul.f32 %v772, %v775
      %v777 = vsub.f32 2.0, %v776
      %v778 = vmul.f32 %v775, %v777
      %v779 = vmul.f32 %v774, %v778
      %v780 = vsel %vm749, %v767, %v779
      %v781 = vsel %vm712, %v780, 0.0
      %782 = vadd.xlane.f32.xlu0 %v781
      %v783 = vpop.xlane.xlu0 %782
      %v784 = vrcp.pop %v783
      %v785 = vmul.f32 %v783, %v784
      %v786 = vsub.f32 2.0, %v785
      %v787 = vmul.f32 %v784, %v786
      %v788 = vmul.f32 %v780, %v787
      %789 = vst [vmem:[#allocation8] sm:$0x3] %v788
      %vm790 = vcmp.eq.s32.totalorder %v728, 0
      %v791 = vsel %vm766, 1, 0
      %v792 = vcvt.s32.f32 %v791
      %vm793 = vcmp.eq.s32.totalorder %v728, 1
      %v794 = vcvt.s32.f32 %v748
      %v795 = vsel %vm793, %v794, 0.0
      %v796 = vsel %vm790, %v792, %v795
      %797 = vst [vmem:[#allocation8 + $0x2] sm:$0x3] %v796
    $region33: #{tpu_custom_call.1} parent=1 // pred_fallthru
      _
    // Predicated region
    $region34: #{tpu_custom_call.1} parent=1 // pred_check
      _
    $region35: #{tpu_custom_call.1} parent=1 // pred_check_branch
      %799 = sbr.rel (0) target = $region37
    $region36: #{tpu_custom_call.1} parent=1 // pred_region
      %801 = vsyncadd [#allocation5], 0
      %s803 = sshll.u32 [#allocation8], 4
      %s804 = int_to_ptr.vmem [resolvable:$true] %s803
      %s805 = sshll.u32 %s4, 4
      %s806 = int_to_ptr.hbm [resolvable:$true] %s805
      %808 = dma.vmem_to_hbm [thread:$0]  %s804, 64, %s806, [#allocation5]
    $region37: #{tpu_custom_call.1} parent=1 // pred_fallthru
      _
    // Predicated region
    $region38: #{tpu_custom_call.1} parent=1 // pred_check
      _
    $region39: #{tpu_custom_call.1} parent=1 // pred_check_branch
      %810 = sbr.rel (0) target = $region41
    $region40: #{tpu_custom_call.1} parent=1 // pred_region
      %812 = dma.done [#allocation5], 64
    $region41: #{tpu_custom_call.1} parent=1 // pred_fallthru
      _
    %813 = vsyncpa [#allocation4], 1
    %814 = vsyncpa [#allocation7], 1
    %815 = vsyncpa [#allocation5], 1

// kernel: tpu_custom_call.1
$region0: #{tpu_custom_call.1}
  #allocation0 [shape = 'u32[]', space=smem, size = 0x4, offset = 0x4, fixed_abs, tag = 'smem constant byte address 0x4 - core index']
  #allocation1 [shape = 'u32[72,128]{1,0:T(1,128)}', space=vmem, size = 0x9000, scoped, tag = 'internal scratch']
  #allocation2 [shape = 'f32[2,128]{1,0:T(2,128)}', space=vmem, size = 0x400, scoped, tag = 'scratch operand']
  %s0 = inlined_call_operand.hbm [shape: f32[2,1024], index: 0, kind: input, shape index: {}]
  %s1 = inlined_call_operand.hbm [shape: bf16[1024,128], index: 1, kind: input, shape index: {}]
  %s2 = inlined_call_operand.vmem [shape: f32[1,128], index: 2, kind: input, shape index: {}]
  %s3 = inlined_call_operand.vmem [shape: f32[1,128], index: 3, kind: input, shape index: {}]
  %s4 = inlined_call_operand.hbm [shape: f32[2,256], index: 4, kind: output, shape index: {}]
  %s5 = sld [smem:[#allocation0]]
  $region42: #{tpu_custom_call.1} parent=0
    _
  %s7 = ssub.s32 1, %s5
  %s8 = scalar_select 0, %s7, %s5
  $region1: #{tpu_custom_call.1} parent=0
    #allocation3 [shape = 'u8[8192]{0}', space=vmem, size = 0x2000, scoped, tag = 'input window, operand 0, single buffered']
    #allocation4 [shape = 's32[1]{0}', space=sflag, size = 0x4, scoped, tag = 'scoped memory for tpu_custom_call.1']
    #allocation5 [shape = 's32[1]{0}', space=sflag, size = 0x4, scoped, tag = 'scoped memory for tpu_custom_call.1']
    #allocation6 [shape = 'u8[262144]{0}', space=vmem, size = 0x40000, scoped, tag = 'input window, operand 1, single buffered']
    #allocation7 [shape = 's32[1]{0}', space=sflag, size = 0x4, scoped, tag = 'scoped memory for tpu_custom_call.1']
    #allocation8 [shape = 'u8[2048]{0}', space=vmem, size = 0x800, scoped, tag = 'output window, operand 0, single buffered']
    %9 = vsyncpa [#allocation4], 0
    %10 = vsyncpa [#allocation7], 0
    %11 = vsyncpa [#allocation5], 0
    // Predicated region
    $region2: #{tpu_custom_call.1} parent=1 // pred_check
      _
    $region3: #{tpu_custom_call.1} parent=1 // pred_check_branch
      %13 = sbr.rel (0) target = $region5
    $region4: #{tpu_custom_call.1} parent=1 // pred_region
      %15 = vsyncadd [#allocation4], 0
      %s17 = sshll.u32 %s0, 4
      %s18 = int_to_ptr.hbm [resolvable:$true] %s17
      %s19 = sshll.u32 [#allocation3], 4
      %s20 = int_to_ptr.vmem [resolvable:$true] %s19
      %22 = dma.hbm_to_vmem [thread:$0]  %s18, 256, %s20, [#allocation4]
    $region5: #{tpu_custom_call.1} parent=1 // pred_fallthru
      _
    // Predicated region
    $region6: #{tpu_custom_call.1} parent=1 // pred_check
      _
    $region7: #{tpu_custom_call.1} parent=1 // pred_check_branch
      %24 = sbr.rel (0) target = $region9
    $region8: #{tpu_custom_call.1} parent=1 // pred_region
      %26 = vsyncadd [#allocation7], 0
      %s27 = sshll.u32 %s1, 4
      %s28 = int_to_ptr.hbm [resolvable:$true] %s27
      %s29 = sshll.u32 [#allocation6], 4
      %s30 = int_to_ptr.vmem [resolvable:$true] %s29
      %35 = dma.hbm_to_vmem [thread:$0]  %s28, 8192, %s30, [#allocation7], 64, 64, 4
    $region9: #{tpu_custom_call.1} parent=1 // pred_fallthru
      _
    // Predicated region
    $region10: #{tpu_custom_call.1} parent=1 // pred_check
      _
    $region11: #{tpu_custom_call.1} parent=1 // pred_check_branch
      %37 = sbr.rel (0) target = $region13
    $region12: #{tpu_custom_call.1} parent=1 // pred_region
      _
    $region13: #{tpu_custom_call.1} parent=1 // pred_fallthru
      _
    // Predicated region
    $region14: #{tpu_custom_call.1} parent=1 // pred_check
      _
    $region15: #{tpu_custom_call.1} parent=1 // pred_check_branch
      %39 = sbr.rel (0) target = $region17
    $region16: #{tpu_custom_call.1} parent=1 // pred_region
      _
    $region17: #{tpu_custom_call.1} parent=1 // pred_fallthru
      _
    // Predicated region
    $region18: #{tpu_custom_call.1} parent=1 // pred_check
      _
    $region19: #{tpu_custom_call.1} parent=1 // pred_check_branch
      %41 = sbr.rel (0) target = $region21
    $region20: #{tpu_custom_call.1} parent=1 // pred_region
      %43 = dma.done [#allocation4], 256
    $region21: #{tpu_custom_call.1} parent=1 // pred_fallthru
      _
    // Predicated region
    $region22: #{tpu_custom_call.1} parent=1 // pred_check
      _
    $region23: #{tpu_custom_call.1} parent=1 // pred_check_branch
      %45 = sbr.rel (0) target = $region25
    $region24: #{tpu_custom_call.1} parent=1 // pred_region
      %47 = dma.done [#allocation7], 8192
    $region25: #{tpu_custom_call.1} parent=1 // pred_fallthru
      _
    %p48 = scmp.eq.s32.totalorder 0, 0
    // Predicated region
    $region26: #{tpu_custom_call.1} parent=1 // pred_check
      %p49 = pneg %p48
    $region27: #{tpu_custom_call.1} parent=1 // pred_check_branch
      %51 = sbr.rel (%p49) target = $region29
    $region28: #{tpu_custom_call.1} parent=1 // pred_region
      %52 = vst [vmem:[#allocation2] sm:$0x3] 0.0
    $region29: #{tpu_custom_call.1} parent=1 // pred_fallthru
      _
    %v53 = vld [vmem:[#allocation3] sm:$0xff]
    %v54 = vld [vmem:[#allocation3 + $0x8] sm:$0xff]
    %57 = vst [vmem:[#allocation1] ss:$4 sm:$0xff] %v53
    %s58 = scalar_lea.vmem [#allocation1], 32
    %59 = vst [vmem:[%s58] ss:$4 sm:$0xff] %v54
    %v60 = vld.sshfl [vmem:[#allocation1] sm:$0xff pattern:$0x73625140]
    %v61 = vld.sshfl [vmem:[#allocation1 + $0x8] sm:$0xff pattern:$0x73625140]
    %v62 = vld.sshfl [vmem:[#allocation1 + $0x10] sm:$0xff pattern:$0x73625140]
    %v63 = vld.sshfl [vmem:[#allocation1 + $0x18] sm:$0xff pattern:$0x73625140]
    %v64 = vld.sshfl [vmem:[#allocation1 + $0x20] sm:$0xff pattern:$0x73625140]
    %v65 = vld.sshfl [vmem:[#allocation1 + $0x28] sm:$0xff pattern:$0x73625140]
    %v66 = vld.sshfl [vmem:[#allocation1 + $0x30] sm:$0xff pattern:$0x73625140]
    %v67 = vld.sshfl [vmem:[#allocation1 + $0x38] sm:$0xff pattern:$0x73625140]
    %v76 = vpack.c.bf16 %v60, %v60
    %v77 = vpack.c.bf16 %v61, %v61
    %v78 = vpack.c.bf16 %v62, %v62
    %v79 = vpack.c.bf16 %v63, %v63
    %v80 = vpack.c.bf16 %v64, %v64
    %v81 = vpack.c.bf16 %v65, %v65
    %v82 = vpack.c.bf16 %v66, %v66
    %v83 = vpack.c.bf16 %v67, %v67
    %v84 = vld [vmem:[#allocation2] sm:$0x3]
    %v85 = vld [vmem:[#allocation6] sm:$0xf]
    %v86 = vld [vmem:[#allocation6 + $0x4] sm:$0xf]
    %v87 = vld [vmem:[#allocation6 + $0x8] sm:$0xf]
    %v88 = vld [vmem:[#allocation6 + $0xc] sm:$0xf]
    %v89 = vld [vmem:[#allocation6 + $0x10] sm:$0xf]
    %v90 = vld [vmem:[#allocation6 + $0x14] sm:$0xf]
    %v91 = vld [vmem:[#allocation6 + $0x18] sm:$0xf]
    %v92 = vld [vmem:[#allocation6 + $0x1c] sm:$0xf]
    %v93 = vld [vmem:[#allocation6 + $0x20] sm:$0xf]
    %v94 = vld [vmem:[#allocation6 + $0x24] sm:$0xf]
    %v95 = vld [vmem:[#allocation6 + $0x28] sm:$0xf]
    %v96 = vld [vmem:[#allocation6 + $0x2c] sm:$0xf]
    %v97 = vld [vmem:[#allocation6 + $0x30] sm:$0xf]
    %v98 = vld [vmem:[#allocation6 + $0x34] sm:$0xf]
    %v99 = vld [vmem:[#allocation6 + $0x38] sm:$0xf]
    %v100 = vld [vmem:[#allocation6 + $0x3c] sm:$0xf]
    %v101 = vld [vmem:[#allocation6 + $0x40] sm:$0xf]
    %v102 = vld [vmem:[#allocation6 + $0x44] sm:$0xf]
    %v103 = vld [vmem:[#allocation6 + $0x48] sm:$0xf]
    %v104 = vld [vmem:[#allocation6 + $0x4c] sm:$0xf]
    %v105 = vld [vmem:[#allocation6 + $0x50] sm:$0xf]
    %v106 = vld [vmem:[#allocation6 + $0x54] sm:$0xf]
    %v107 = vld [vmem:[#allocation6 + $0x58] sm:$0xf]
    %v108 = vld [vmem:[#allocation6 + $0x5c] sm:$0xf]
    %v109 = vld [vmem:[#allocation6 + $0x60] sm:$0xf]
    %v110 = vld [vmem:[#allocation6 + $0x64] sm:$0xf]
    %v111 = vld [vmem:[#allocation6 + $0x68] sm:$0xf]
    %v112 = vld [vmem:[#allocation6 + $0x6c] sm:$0xf]
    %v113 = vld [vmem:[#allocation6 + $0x70] sm:$0xf]
    %v114 = vld [vmem:[#allocation6 + $0x74] sm:$0xf]
    %v115 = vld [vmem:[#allocation6 + $0x78] sm:$0xf]
    %v116 = vld [vmem:[#allocation6 + $0x7c] sm:$0xf]
    %v117 = vld [vmem:[#allocation6 + $0x80] sm:$0xf]
    %v118 = vld [vmem:[#allocation6 + $0x84] sm:$0xf]
    %v119 = vld [vmem:[#allocation6 + $0x88] sm:$0xf]
    %v120 = vld [vmem:[#allocation6 + $0x8c] sm:$0xf]
    %v121 = vld [vmem:[#allocation6 + $0x90] sm:$0xf]
    %v122 = vld [vmem:[#allocation6 + $0x94] sm:$0xf]
    %v123 = vld [vmem:[#allocation6 + $0x98] sm:$0xf]
    %v124 = vld [vmem:[#allocation6 + $0x9c] sm:$0xf]
    %v125 = vld [vmem:[#allocation6 + $0xa0] sm:$0xf]
    %v126 = vld [vmem:[#allocation6 + $0xa4] sm:$0xf]
    %v127 = vld [vmem:[#allocation6 + $0xa8] sm:$0xf]
    %v128 = vld [vmem:[#allocation6 + $0xac] sm:$0xf]
    %v129 = vld [vmem:[#allocation6 + $0xb0] sm:$0xf]
    %v130 = vld [vmem:[#allocation6 + $0xb4] sm:$0xf]
    %v131 = vld [vmem:[#allocation6 + $0xb8] sm:$0xf]
    %v132 = vld [vmem:[#allocation6 + $0xbc] sm:$0xf]
    %v133 = vld [vmem:[#allocation6 + $0xc0] sm:$0xf]
    %v134 = vld [vmem:[#allocation6 + $0xc4] sm:$0xf]
    %v135 = vld [vmem:[#allocation6 + $0xc8] sm:$0xf]
    %v136 = vld [vmem:[#allocation6 + $0xcc] sm:$0xf]
    %v137 = vld [vmem:[#allocation6 + $0xd0] sm:$0xf]
    %v138 = vld [vmem:[#allocation6 + $0xd4] sm:$0xf]
    %v139 = vld [vmem:[#allocation6 + $0xd8] sm:$0xf]
    %v140 = vld [vmem:[#allocation6 + $0xdc] sm:$0xf]
    %v141 = vld [vmem:[#allocation6 + $0xe0] sm:$0xf]
    %v142 = vld [vmem:[#allocation6 + $0xe4] sm:$0xf]
    %v143 = vld [vmem:[#allocation6 + $0xe8] sm:$0xf]
    %v144 = vld [vmem:[#allocation6 + $0xec] sm:$0xf]
    %v145 = vld [vmem:[#allocation6 + $0xf0] sm:$0xf]
    %v146 = vld [vmem:[#allocation6 + $0xf4] sm:$0xf]
    %v147 = vld [vmem:[#allocation6 + $0xf8] sm:$0xf]
    %v148 = vld [vmem:[#allocation6 + $0xfc] sm:$0xf]
    %v149 = vld [vmem:[#allocation6 + $0x100] sm:$0xf]
    %v150 = vld [vmem:[#allocation6 + $0x104] sm:$0xf]
    %v151 = vld [vmem:[#allocation6 + $0x108] sm:$0xf]
    %v152 = vld [vmem:[#allocation6 + $0x10c] sm:$0xf]
    %v153 = vld [vmem:[#allocation6 + $0x110] sm:$0xf]
    %v154 = vld [vmem:[#allocation6 + $0x114] sm:$0xf]
    %v155 = vld [vmem:[#allocation6 + $0x118] sm:$0xf]
    %v156 = vld [vmem:[#allocation6 + $0x11c] sm:$0xf]
    %v157 = vld [vmem:[#allocation6 + $0x120] sm:$0xf]
    %v158 = vld [vmem:[#allocation6 + $0x124] sm:$0xf]
    %v159 = vld [vmem:[#allocation6 + $0x128] sm:$0xf]
    %v160 = vld [vmem:[#allocation6 + $0x12c] sm:$0xf]
    %v161 = vld [vmem:[#allocation6 + $0x130] sm:$0xf]
    %v162 = vld [vmem:[#allocation6 + $0x134] sm:$0xf]
    %v163 = vld [vmem:[#allocation6 + $0x138] sm:$0xf]
    %v164 = vld [vmem:[#allocation6 + $0x13c] sm:$0xf]
    %v165 = vld [vmem:[#allocation6 + $0x140] sm:$0xf]
    %v166 = vld [vmem:[#allocation6 + $0x144] sm:$0xf]
    %v167 = vld [vmem:[#allocation6 + $0x148] sm:$0xf]
    %v168 = vld [vmem:[#allocation6 + $0x14c] sm:$0xf]
    %v169 = vld [vmem:[#allocation6 + $0x150] sm:$0xf]
    %v170 = vld [vmem:[#allocation6 + $0x154] sm:$0xf]
    %v171 = vld [vmem:[#allocation6 + $0x158] sm:$0xf]
    %v172 = vld [vmem:[#allocation6 + $0x15c] sm:$0xf]
    %v173 = vld [vmem:[#allocation6 + $0x160] sm:$0xf]
    %v174 = vld [vmem:[#allocation6 + $0x164] sm:$0xf]
    %v175 = vld [vmem:[#allocation6 + $0x168] sm:$0xf]
    %v176 = vld [vmem:[#allocation6 + $0x16c] sm:$0xf]
    %v177 = vld [vmem:[#allocation6 + $0x170] sm:$0xf]
    %v178 = vld [vmem:[#allocation6 + $0x174] sm:$0xf]
    %v179 = vld [vmem:[#allocation6 + $0x178] sm:$0xf]
    %v180 = vld [vmem:[#allocation6 + $0x17c] sm:$0xf]
    %v181 = vld [vmem:[#allocation6 + $0x180] sm:$0xf]
    %v182 = vld [vmem:[#allocation6 + $0x184] sm:$0xf]
    %v183 = vld [vmem:[#allocation6 + $0x188] sm:$0xf]
    %v184 = vld [vmem:[#allocation6 + $0x18c] sm:$0xf]
    %v185 = vld [vmem:[#allocation6 + $0x190] sm:$0xf]
    %v186 = vld [vmem:[#allocation6 + $0x194] sm:$0xf]
    %v187 = vld [vmem:[#allocation6 + $0x198] sm:$0xf]
    %v188 = vld [vmem:[#allocation6 + $0x19c] sm:$0xf]
    %v189 = vld [vmem:[#allocation6 + $0x1a0] sm:$0xf]
    %v190 = vld [vmem:[#allocation6 + $0x1a4] sm:$0xf]
    %v191 = vld [vmem:[#allocation6 + $0x1a8] sm:$0xf]
    %v192 = vld [vmem:[#allocation6 + $0x1ac] sm:$0xf]
    %v193 = vld [vmem:[#allocation6 + $0x1b0] sm:$0xf]
    %v194 = vld [vmem:[#allocation6 + $0x1b4] sm:$0xf]
    %v195 = vld [vmem:[#allocation6 + $0x1b8] sm:$0xf]
    %v196 = vld [vmem:[#allocation6 + $0x1bc] sm:$0xf]
    %v197 = vld [vmem:[#allocation6 + $0x1c0] sm:$0xf]
    %v198 = vld [vmem:[#allocation6 + $0x1c4] sm:$0xf]
    %v199 = vld [vmem:[#allocation6 + $0x1c8] sm:$0xf]
    %v200 = vld [vmem:[#allocation6 + $0x1cc] sm:$0xf]
    %v201 = vld [vmem:[#allocation6 + $0x1d0] sm:$0xf]
    %v202 = vld [vmem:[#allocation6 + $0x1d4] sm:$0xf]
    %v203 = vld [vmem:[#allocation6 + $0x1d8] sm:$0xf]
    %v204 = vld [vmem:[#allocation6 + $0x1dc] sm:$0xf]
    %v205 = vld [vmem:[#allocation6 + $0x1e0] sm:$0xf]
    %v206 = vld [vmem:[#allocation6 + $0x1e4] sm:$0xf]
    %v207 = vld [vmem:[#allocation6 + $0x1e8] sm:$0xf]
    %v208 = vld [vmem:[#allocation6 + $0x1ec] sm:$0xf]
    %v209 = vld [vmem:[#allocation6 + $0x1f0] sm:$0xf]
    %v210 = vld [vmem:[#allocation6 + $0x1f4] sm:$0xf]
    %v211 = vld [vmem:[#allocation6 + $0x1f8] sm:$0xf]
    %v212 = vld [vmem:[#allocation6 + $0x1fc] sm:$0xf]
    %v341 = vunpack.c.l.b16 %v85
    %v342 = vunpack.c.l.b16 %v86
    %v343 = vunpack.c.l.b16 %v87
    %v344 = vunpack.c.l.b16 %v88
    %v345 = vunpack.c.l.b16 %v89
    %v346 = vunpack.c.l.b16 %v90
    %v347 = vunpack.c.l.b16 %v91
    %v348 = vunpack.c.l.b16 %v92
    %v349 = vunpack.c.l.b16 %v93
    %v350 = vunpack.c.l.b16 %v94
    %v351 = vunpack.c.l.b16 %v95
    %v352 = vunpack.c.l.b16 %v96
    %v353 = vunpack.c.l.b16 %v97
    %v354 = vunpack.c.l.b16 %v98
    %v355 = vunpack.c.l.b16 %v99
    %v356 = vunpack.c.l.b16 %v100
    %v357 = vunpack.c.l.b16 %v101
    %v358 = vunpack.c.l.b16 %v102
    %v359 = vunpack.c.l.b16 %v103
    %v360 = vunpack.c.l.b16 %v104
    %v361 = vunpack.c.l.b16 %v105
    %v362 = vunpack.c.l.b16 %v106
    %v363 = vunpack.c.l.b16 %v107
    %v364 = vunpack.c.l.b16 %v108
    %v365 = vunpack.c.l.b16 %v109
    %v366 = vunpack.c.l.b16 %v110
    %v367 = vunpack.c.l.b16 %v111
    %v368 = vunpack.c.l.b16 %v112
    %v369 = vunpack.c.l.b16 %v113
    %v370 = vunpack.c.l.b16 %v114
    %v371 = vunpack.c.l.b16 %v115
    %v372 = vunpack.c.l.b16 %v116
    %v373 = vunpack.c.l.b16 %v117
    %v374 = vunpack.c.l.b16 %v118
    %v375 = vunpack.c.l.b16 %v119
    %v376 = vunpack.c.l.b16 %v120
    %v377 = vunpack.c.l.b16 %v121
    %v378 = vunpack.c.l.b16 %v122
    %v379 = vunpack.c.l.b16 %v123
    %v380 = vunpack.c.l.b16 %v124
    %v381 = vunpack.c.l.b16 %v125
    %v382 = vunpack.c.l.b16 %v126
    %v383 = vunpack.c.l.b16 %v127
    %v384 = vunpack.c.l.b16 %v128
    %v385 = vunpack.c.l.b16 %v129
    %v386 = vunpack.c.l.b16 %v130
    %v387 = vunpack.c.l.b16 %v131
    %v388 = vunpack.c.l.b16 %v132
    %v389 = vunpack.c.l.b16 %v133
    %v390 = vunpack.c.l.b16 %v134
    %v391 = vunpack.c.l.b16 %v135
    %v392 = vunpack.c.l.b16 %v136
    %v393 = vunpack.c.l.b16 %v137
    %v394 = vunpack.c.l.b16 %v138
    %v395 = vunpack.c.l.b16 %v139
    %v396 = vunpack.c.l.b16 %v140
    %v397 = vunpack.c.l.b16 %v141
    %v398 = vunpack.c.l.b16 %v142
    %v399 = vunpack.c.l.b16 %v143
    %v400 = vunpack.c.l.b16 %v144
    %v401 = vunpack.c.l.b16 %v145
    %v402 = vunpack.c.l.b16 %v146
    %v403 = vunpack.c.l.b16 %v147
    %v404 = vunpack.c.l.b16 %v148
    %v405 = vunpack.c.l.b16 %v149
    %v406 = vunpack.c.l.b16 %v150
    %v407 = vunpack.c.l.b16 %v151
    %v408 = vunpack.c.l.b16 %v152
    %v409 = vunpack.c.l.b16 %v153
    %v410 = vunpack.c.l.b16 %v154
    %v411 = vunpack.c.l.b16 %v155
    %v412 = vunpack.c.l.b16 %v156
    %v413 = vunpack.c.l.b16 %v157
    %v414 = vunpack.c.l.b16 %v158
    %v415 = vunpack.c.l.b16 %v159
    %v416 = vunpack.c.l.b16 %v160
    %v417 = vunpack.c.l.b16 %v161
    %v418 = vunpack.c.l.b16 %v162
    %v419 = vunpack.c.l.b16 %v163
    %v420 = vunpack.c.l.b16 %v164
    %v421 = vunpack.c.l.b16 %v165
    %v422 = vunpack.c.l.b16 %v166
    %v423 = vunpack.c.l.b16 %v167
    %v424 = vunpack.c.l.b16 %v168
    %v425 = vunpack.c.l.b16 %v169
    %v426 = vunpack.c.l.b16 %v170
    %v427 = vunpack.c.l.b16 %v171
    %v428 = vunpack.c.l.b16 %v172
    %v429 = vunpack.c.l.b16 %v173
    %v430 = vunpack.c.l.b16 %v174
    %v431 = vunpack.c.l.b16 %v175
    %v432 = vunpack.c.l.b16 %v176
    %v433 = vunpack.c.l.b16 %v177
    %v434 = vunpack.c.l.b16 %v178
    %v435 = vunpack.c.l.b16 %v179
    %v436 = vunpack.c.l.b16 %v180
    %v437 = vunpack.c.l.b16 %v181
    %v438 = vunpack.c.l.b16 %v182
    %v439 = vunpack.c.l.b16 %v183
    %v440 = vunpack.c.l.b16 %v184
    %v441 = vunpack.c.l.b16 %v185
    %v442 = vunpack.c.l.b16 %v186
    %v443 = vunpack.c.l.b16 %v187
    %v444 = vunpack.c.l.b16 %v188
    %v445 = vunpack.c.l.b16 %v189
    %v446 = vunpack.c.l.b16 %v190
    %v447 = vunpack.c.l.b16 %v191
    %v448 = vunpack.c.l.b16 %v192
    %v449 = vunpack.c.l.b16 %v193
    %v450 = vunpack.c.l.b16 %v194
    %v451 = vunpack.c.l.b16 %v195
    %v452 = vunpack.c.l.b16 %v196
    %v453 = vunpack.c.l.b16 %v197
    %v454 = vunpack.c.l.b16 %v198
    %v455 = vunpack.c.l.b16 %v199
    %v456 = vunpack.c.l.b16 %v200
    %v457 = vunpack.c.l.b16 %v201
    %v458 = vunpack.c.l.b16 %v202
    %v459 = vunpack.c.l.b16 %v203
    %v460 = vunpack.c.l.b16 %v204
    %v461 = vunpack.c.l.b16 %v205
    %v462 = vunpack.c.l.b16 %v206
    %v463 = vunpack.c.l.b16 %v207
    %v464 = vunpack.c.l.b16 %v208
    %v465 = vunpack.c.l.b16 %v209
    %v466 = vunpack.c.l.b16 %v210
    %v467 = vunpack.c.l.b16 %v211
    %v468 = vunpack.c.l.b16 %v212
    %v469 = vpack.c.b16 %v342, %v341
    %v470 = vpack.c.b16 %v344, %v343
    %v471 = vpack.c.b16 %v346, %v345
    %v472 = vpack.c.b16 %v348, %v347
    %v473 = vpack.c.b16 %v350, %v349
    %v474 = vpack.c.b16 %v352, %v351
    %v475 = vpack.c.b16 %v354, %v353
    %v476 = vpack.c.b16 %v356, %v355
    %v477 = vpack.c.b16 %v358, %v357
    %v478 = vpack.c.b16 %v360, %v359
    %v479 = vpack.c.b16 %v362, %v361
    %v480 = vpack.c.b16 %v364, %v363
    %v481 = vpack.c.b16 %v366, %v365
    %v482 = vpack.c.b16 %v368, %v367
    %v483 = vpack.c.b16 %v370, %v369
    %v484 = vpack.c.b16 %v372, %v371
    %v485 = vpack.c.b16 %v374, %v373
    %v486 = vpack.c.b16 %v376, %v375
    %v487 = vpack.c.b16 %v378, %v377
    %v488 = vpack.c.b16 %v380, %v379
    %v489 = vpack.c.b16 %v382, %v381
    %v490 = vpack.c.b16 %v384, %v383
    %v491 = vpack.c.b16 %v386, %v385
    %v492 = vpack.c.b16 %v388, %v387
    %v493 = vpack.c.b16 %v390, %v389
    %v494 = vpack.c.b16 %v392, %v391
    %v495 = vpack.c.b16 %v394, %v393
    %v496 = vpack.c.b16 %v396, %v395
    %v497 = vpack.c.b16 %v398, %v397
    %v498 = vpack.c.b16 %v400, %v399
    %v499 = vpack.c.b16 %v402, %v401
    %v500 = vpack.c.b16 %v404, %v403
    %v501 = vpack.c.b16 %v406, %v405
    %v502 = vpack.c.b16 %v408, %v407
    %v503 = vpack.c.b16 %v410, %v409
    %v504 = vpack.c.b16 %v412, %v411
    %v505 = vpack.c.b16 %v414, %v413
    %v506 = vpack.c.b16 %v416, %v415
    %v507 = vpack.c.b16 %v418, %v417
    %v508 = vpack.c.b16 %v420, %v419
    %v509 = vpack.c.b16 %v422, %v421
    %v510 = vpack.c.b16 %v424, %v423
    %v511 = vpack.c.b16 %v426, %v425
    %v512 = vpack.c.b16 %v428, %v427
    %v513 = vpack.c.b16 %v430, %v429
    %v514 = vpack.c.b16 %v432, %v431
    %v515 = vpack.c.b16 %v434, %v433
    %v516 = vpack.c.b16 %v436, %v435
    %v517 = vpack.c.b16 %v438, %v437
    %v518 = vpack.c.b16 %v440, %v439
    %v519 = vpack.c.b16 %v442, %v441
    %v520 = vpack.c.b16 %v444, %v443
    %v521 = vpack.c.b16 %v446, %v445
    %v522 = vpack.c.b16 %v448, %v447
    %v523 = vpack.c.b16 %v450, %v449
    %v524 = vpack.c.b16 %v452, %v451
    %v525 = vpack.c.b16 %v454, %v453
    %v526 = vpack.c.b16 %v456, %v455
    %v527 = vpack.c.b16 %v458, %v457
    %v528 = vpack.c.b16 %v460, %v459
    %v529 = vpack.c.b16 %v462, %v461
    %v530 = vpack.c.b16 %v464, %v463
    %v531 = vpack.c.b16 %v466, %v465
    %v532 = vpack.c.b16 %v468, %v467
    %597 = vmatpush.bf16.msra.mxu0 %v476
    %598 = vmatpush.bf16.msra.mxu0 %v475
    %599 = vmatpush.bf16.msra.mxu0 %v474
    %600 = vmatpush.bf16.msra.mxu0 %v473
    %601 = vmatpush.bf16.msra.mxu0 %v472
    %602 = vmatpush.bf16.msra.mxu0 %v471
    %603 = vmatpush.bf16.msra.mxu0 %v470
    %604 = vmatpush.bf16.msra.mxu0 %v469
    %605 = vmatmul.bf16.gmra.mxu0 %v76
    %v606 = vpop.f32.mrf.mxu0
    %v607 = vadd.f32 0.0, %v606
    %v608 = vpop.f32.mrf.mxu0
    %609 = vdwg.mxu0
    %610 = vmatpush.bf16.msra.mxu0 %v484
    %611 = vmatpush.bf16.msra.mxu0 %v483
    %612 = vmatpush.bf16.msra.mxu0 %v482
    %613 = vmatpush.bf16.msra.mxu0 %v481
    %614 = vmatpush.bf16.msra.mxu0 %v480
    %615 = vmatpush.bf16.msra.mxu0 %v479
    %616 = vmatpush.bf16.msra.mxu0 %v478
    %617 = vmatpush.bf16.msra.mxu0 %v477
    %618 = vmatmul.bf16.gmra.mxu0 %v77
    %v619 = vpop.f32.mrf.mxu0
    %v620 = vadd.f32 %v607, %v619
    %v621 = vpop.f32.mrf.mxu0
    %622 = vdwg.mxu0
    %623 = vmatpush.bf16.msra.mxu0 %v492
    %624 = vmatpush.bf16.msra.mxu0 %v491
    %625 = vmatpush.bf16.msra.mxu0 %v490
    %626 = vmatpush.bf16.msra.mxu0 %v489
    %627 = vmatpush.bf16.msra.mxu0 %v488
    %628 = vmatpush.bf16.msra.mxu0 %v487
    %629 = vmatpush.bf16.msra.mxu0 %v486
    %630 = vmatpush.bf16.msra.mxu0 %v485
    %631 = vmatmul.bf16.gmra.mxu0 %v78
    %v632 = vpop.f32.mrf.mxu0
    %v633 = vadd.f32 %v620, %v632
    %v634 = vpop.f32.mrf.mxu0
    %635 = vdwg.mxu0
    %636 = vmatpush.bf16.msra.mxu0 %v500
    %637 = vmatpush.bf16.msra.mxu0 %v499
    %638 = vmatpush.bf16.msra.mxu0 %v498
    %639 = vmatpush.bf16.msra.mxu0 %v497
    %640 = vmatpush.bf16.msra.mxu0 %v496
    %641 = vmatpush.bf16.msra.mxu0 %v495
    %642 = vmatpush.bf16.msra.mxu0 %v494
    %643 = vmatpush.bf16.msra.mxu0 %v493
    %644 = vmatmul.bf16.gmra.mxu0 %v79
    %v645 = vpop.f32.mrf.mxu0
    %v646 = vadd.f32 %v633, %v645
    %v647 = vpop.f32.mrf.mxu0
    %648 = vdwg.mxu0
    %649 = vmatpush.bf16.msra.mxu0 %v508
    %650 = vmatpush.bf16.msra.mxu0 %v507
    %651 = vmatpush.bf16.msra.mxu0 %v506
    %652 = vmatpush.bf16.msra.mxu0 %v505
    %653 = vmatpush.bf16.msra.mxu0 %v504
    %654 = vmatpush.bf16.msra.mxu0 %v503
    %655 = vmatpush.bf16.msra.mxu0 %v502
    %656 = vmatpush.bf16.msra.mxu0 %v501
    %657 = vmatmul.bf16.gmra.mxu0 %v80
    %v658 = vpop.f32.mrf.mxu0
    %v659 = vadd.f32 %v646, %v658
    %v660 = vpop.f32.mrf.mxu0
    %661 = vdwg.mxu0
    %662 = vmatpush.bf16.msra.mxu0 %v516
    %663 = vmatpush.bf16.msra.mxu0 %v515
    %664 = vmatpush.bf16.msra.mxu0 %v514
    %665 = vmatpush.bf16.msra.mxu0 %v513
    %666 = vmatpush.bf16.msra.mxu0 %v512
    %667 = vmatpush.bf16.msra.mxu0 %v511
    %668 = vmatpush.bf16.msra.mxu0 %v510
    %669 = vmatpush.bf16.msra.mxu0 %v509
    %670 = vmatmul.bf16.gmra.mxu0 %v81
    %v671 = vpop.f32.mrf.mxu0
    %v672 = vadd.f32 %v659, %v671
    %v673 = vpop.f32.mrf.mxu0
    %674 = vdwg.mxu0
    %675 = vmatpush.bf16.msra.mxu0 %v524
    %676 = vmatpush.bf16.msra.mxu0 %v523
    %677 = vmatpush.bf16.msra.mxu0 %v522
    %678 = vmatpush.bf16.msra.mxu0 %v521
    %679 = vmatpush.bf16.msra.mxu0 %v520
    %680 = vmatpush.bf16.msra.mxu0 %v519
    %681 = vmatpush.bf16.msra.mxu0 %v518
    %682 = vmatpush.bf16.msra.mxu0 %v517
    %683 = vmatmul.bf16.gmra.mxu0 %v82
    %v684 = vpop.f32.mrf.mxu0
    %v685 = vadd.f32 %v672, %v684
    %v686 = vpop.f32.mrf.mxu0
    %687 = vdwg.mxu0
    %688 = vmatpush.bf16.msra.mxu0 %v532
    %689 = vmatpush.bf16.msra.mxu0 %v531
    %690 = vmatpush.bf16.msra.mxu0 %v530
    %691 = vmatpush.bf16.msra.mxu0 %v529
    %692 = vmatpush.bf16.msra.mxu0 %v528
    %693 = vmatpush.bf16.msra.mxu0 %v527
    %694 = vmatpush.bf16.msra.mxu0 %v526
    %695 = vmatpush.bf16.msra.mxu0 %v525
    %696 = vmatmul.bf16.gmra.mxu0 %v83
    %v697 = vpop.f32.mrf.mxu0
    %v698 = vadd.f32 %v685, %v697
    %v699 = vpop.f32.mrf.mxu0
    %700 = vdwg.mxu0
    %v701 = vadd.f32 %v84, %v698
    %702 = vst [vmem:[#allocation2] sm:$0x3] %v701
    // Predicated region
    $region30: #{tpu_custom_call.1} parent=1 // pred_check
      %p703 = pneg %p48
    $region31: #{tpu_custom_call.1} parent=1 // pred_check_branch
      %705 = sbr.rel (%p703) target = $region33
    $region32: #{tpu_custom_call.1} parent=1 // pred_region
      %v706 = vld [vmem:[#allocation2] sm:$0x3]
      %v707 = vld [vmem:[%s2] sm:$0x1]
      %v709 = vperm.slane %v707, 0
      %v711 = vadd.f32 %v706, %v709
      %vm712 = vcmask 1041408
      %v713 = vsel %vm712, %v711, -inf
      %714 = vmax.xlane.f32.xlu0 %v713
      %v715 = vpop.xlane.xlu0 %714
      %v716 = vsub.f32 %v711, %v715
      %v717 = vmul.f32 %v716, 1.442695
      %v718 = vpow.pop %v717
      %v719 = vsel %vm712, %v718, 0.0
      %720 = vadd.xlane.f32.xlu0 %v719
      %v721 = vpop.xlane.xlu0 %720
      %v722 = vrcp.pop %v721
      %v723 = vmul.f32 %v721, %v722
      %v724 = vsub.f32 2.0, %v723
      %v725 = vmul.f32 %v722, %v724
      %v726 = vmul.f32 %v718, %v725
      %v727 = vlaneseq
      %v728 = vand.u32 %v727, 127
      %v729 = vsel %vm712, %v726, -inf
      %730 = vmax.xlane.f32.xlu0 %v729
      %v731 = vpop.xlane.xlu0 %730
      %vm732 = vcmp.eq.f32.partialorder %v726, %v731
      %v733 = vsel %vm732, %v728, 128
      %v734 = vsel %vm712, %v733, 2147483647
      %v735 = vand.u32 %v734, 65535
      %v736 = vshra.s32 %v734, 16
      %v737 = vcvt.s32.f32 %v735
      %v738 = vcvt.s32.f32 %v736
      %739 = vmin.xlane.f32.xlu0 %v738
      %v740 = vpop.xlane.xlu0 %739
      %vm741 = vcmp.eq.f32.partialorder %v738, %v740
      %v742 = vsel %vm741, %v737, inf
      %743 = vmin.xlane.f32.xlu0 %v742
      %v744 = vpop.xlane.xlu0 %743
      %v745 = vcvt.f32.s32 %v744
      %v746 = vcvt.f32.s32 %v740
      %v747 = vshll.u32 %v746, 16
      %v748 = vadd.s32 %v747, %v745
      %vm749 = vcmp.eq.s32.totalorder %v728, %v748
      %v750 = vmul.f32 %v731, 15.0
      %v751 = vfloor.f32 %v750
      %v752 = vcvt.f32.s32.to.zero.pseudo %v751
      %vm753 = vcmp.gt.s32.totalorder %v752, 0
      %v754 = vsel %vm753, %v752, 0
      %vm755 = vcmp.lt.s32.totalorder %v754, 14
      %v756 = vsel %vm755, %v754, 14
      %vm757 = vcmp.eq.s32.totalorder %v728, %v756
      %v758 = vld [vmem:[%s3] sm:$0x1]
      %v760 = vperm.slane %v758, 0
      %v762 = vsel %vm757, %v760, 0.0
      %v763 = vsel %vm712, %v762, 0.0
      %764 = vadd.xlane.f32.xlu0 %v763
      %v765 = vpop.xlane.xlu0 %764
      %vm766 = vcmp.ne.f32.partialorder %v765, -1.0
      %v767 = vsel %vm766, %v765, %v731
      %v768 = vsel %vm749, 0.0, %v726
      %v769 = vsel %vm712, %v768, 0.0
      %770 = vadd.xlane.f32.xlu0 %v769
      %v771 = vpop.xlane.xlu0 %770
      %v772 = vmax.f32 %v771, 1e-30
      %v773 = vsub.f32 1.0, %v767
      %v774 = vmul.f32 %v773, %v768
      %v775 = vrcp.pop %v772
      %v776 = vmul.f32 %v772, %v775
      %v777 = vsub.f32 2.0, %v776
      %v778 = vmul.f32 %v775, %v777
      %v779 = vmul.f32 %v774, %v778
      %v780 = vsel %vm749, %v767, %v779
      %v781 = vsel %vm712, %v780, 0.0
      %782 = vadd.xlane.f32.xlu0 %v781
      %v783 = vpop.xlane.xlu0 %782
      %v784 = vrcp.pop %v783
      %v785 = vmul.f32 %v783, %v784
      %v786 = vsub.f32 2.0, %v785
      %v787 = vmul.f32 %v784, %v786
      %v788 = vmul.f32 %v780, %v787
      %789 = vst [vmem:[#allocation8] sm:$0x3] %v788
      %vm790 = vcmp.eq.s32.totalorder %v728, 0
      %v791 = vsel %vm766, 1, 0
      %v792 = vcvt.s32.f32 %v791
      %vm793 = vcmp.eq.s32.totalorder %v728, 1
      %v794 = vcvt.s32.f32 %v748
      %v795 = vsel %vm793, %v794, 0.0
      %v796 = vsel %vm790, %v792, %v795
      %797 = vst [vmem:[#allocation8 + $0x2] sm:$0x3] %v796
    $region33: #{tpu_custom_call.1} parent=1 // pred_fallthru
      _
    // Predicated region
    $region34: #{tpu_custom_call.1} parent=1 // pred_check
      _
    $region35: #{tpu_custom_call.1} parent=1 // pred_check_branch
      %799 = sbr.rel (0) target = $region37
    $region36: #{tpu_custom_call.1} parent=1 // pred_region
      %801 = vsyncadd [#allocation5], 0
      %s803 = sshll.u32 [#allocation8], 4
      %s804 = int_to_ptr.vmem [resolvable:$true] %s803
      %s805 = sshll.u32 %s4, 4
      %s806 = int_to_ptr.hbm [resolvable:$true] %s805
      %808 = dma.vmem_to_hbm [thread:$0]  %s804, 64, %s806, [#allocation5]
    $region37: #{tpu_custom_call.1} parent=1 // pred_fallthru
      _
    // Predicated region
    $region38: #{tpu_custom_call.1} parent=1 // pred_check
      _
    $region39: #{tpu_custom_call.1} parent=1 // pred_check_branch
      %810 = sbr.rel (0) target = $region41
    $region40: #{tpu_custom_call.1} parent=1 // pred_region
      %812 = dma.done [#allocation5], 64
    $region41: #{tpu_custom_call.1} parent=1 // pred_fallthru
      _
    %813 = vsyncpa [#allocation4], 1
    %814 = vsyncpa [#allocation7], 1
    %815 = vsyncpa [#allocation5], 1

</llo_original>
